<compile_context>
chip_gen: v5e
topology: v5e:2x2
jax: 0.10.0
libtpu: 0.0.40
codegen_flags: <defaults>
</compile_context>

<pallas_src>
import functools

import jax
import jax.numpy as jnp
from jax.experimental import pallas as pl
from jax.experimental.pallas import tpu as pltpu


def _cconv_kernel(x_ref, w_ref, b_ref, o_ref, *, kh, kw, h_out, w_out):
    """One batch element of the fused (real|imag) conv.

    x_ref: (1, H_pad, W_pad, Cin2)   padded NHWC input block (Cin2 = 2*Cin, real|imag fused)
    w_ref: (kh, kw, Cin2, Cout2)     combined block weights [[Wr, Wi], [-Wi, Wr]]
    b_ref: (1, Cout2)                combined bias [br - bi, br + bi]
    o_ref: (1, h_out, w_out, Cout2)  stride-1 output block
    """
    cin = x_ref.shape[-1]
    cout = o_ref.shape[-1]

    acc = jnp.zeros((h_out * w_out, cout), dtype=jnp.float32)
    # kh*kw shifted-window MXU matmuls; static Python loop (unrolled, 9 taps for 3x3).
    for dh in range(kh):
        for dw in range(kw):
            patch = x_ref[0, pl.ds(dh, h_out), pl.ds(dw, w_out), :]       # (h_out, w_out, cin)
            lhs = patch.reshape(h_out * w_out, cin).astype(jnp.float32)   # (HW, cin)
            rhs = w_ref[dh, dw, :, :].astype(jnp.float32)                 # (cin, cout)
            acc = acc + jnp.dot(lhs, rhs, preferred_element_type=jnp.float32)
    acc = acc + b_ref[...].astype(jnp.float32)                            # (1, cout) broadcast
    o_ref[0] = acc.reshape(h_out, w_out, cout).astype(o_ref.dtype)


def complex_conv2d(x, wr, wi, br, bi, *, stride=1, padding=0):
    """Complex 2D convolution matching the PyTorch ComplexConv2d forward.

    x:  (N, Cin, H, W) complex64, or (N, Cin, H, W, 2) real (packed real/imag).
    wr, wi: (Cout, Cin, kh, kw) float32  -- real_conv / imag_conv weights (OIHW).
    br, bi: (Cout,) float32              -- real_conv / imag_conv biases.
    Returns (N, Cout, H_out, W_out) complex64.
    """
    # Mirror the module's input handling.
    if not jnp.iscomplexobj(x) and x.ndim == 5 and x.shape[-1] == 2:
        x = jax.lax.complex(x[..., 0], x[..., 1])
    x = x.astype(jnp.complex64)

    N, Cin, H, W = x.shape
    Cout, _, kh, kw = wr.shape
    cin2, cout2 = 2 * Cin, 2 * Cout

    h_out1 = H + 2 * padding - kh + 1          # stride-1 output extent
    w_out1 = W + 2 * padding - kw + 1
    h_out = (H + 2 * padding - kh) // stride + 1
    w_out = (W + 2 * padding - kw) // stride + 1
    H_pad, W_pad = H + 2 * padding, W + 2 * padding

    # Fuse real/imag into a single real conv over 2*Cin input / 2*Cout output channels.
    xr = jnp.real(x).astype(jnp.float32)
    xi = jnp.imag(x).astype(jnp.float32)
    x2 = jnp.concatenate([xr, xi], axis=1)                            # (N, 2Cin, H, W)
    x2 = jnp.transpose(x2, (0, 2, 3, 1))                              # NHWC
    x_pad = jnp.pad(x2, ((0, 0), (padding, padding), (padding, padding), (0, 0)))

    wr_h = jnp.transpose(wr.astype(jnp.float32), (2, 3, 1, 0))        # (kh, kw, Cin, Cout)
    wi_h = jnp.transpose(wi.astype(jnp.float32), (2, 3, 1, 0))
    top = jnp.concatenate([wr_h, wi_h], axis=-1)                      # rows fed by x.real
    bot = jnp.concatenate([-wi_h, wr_h], axis=-1)                     # rows fed by x.imag
    w_comb = jnp.concatenate([top, bot], axis=-2)                     # (kh, kw, 2Cin, 2Cout)
    b_comb = jnp.concatenate([br - bi, br + bi]).astype(jnp.float32).reshape(1, cout2)

    kernel = functools.partial(_cconv_kernel, kh=kh, kw=kw, h_out=h_out1, w_out=w_out1)

    out_nhwc = pl.pallas_call(
        kernel,
        out_shape=jax.ShapeDtypeStruct((N, h_out1, w_out1, cout2), jnp.float32),
        grid_spec=pltpu.PrefetchScalarGridSpec(
            num_scalar_prefetch=0,
            grid=(N,),
            in_specs=[
                pl.BlockSpec((1, H_pad, W_pad, cin2), lambda n: (n, 0, 0, 0)),
                pl.BlockSpec((kh, kw, cin2, cout2), lambda n: (0, 0, 0, 0)),  # resident
                pl.BlockSpec((1, cout2), lambda n: (0, 0)),                   # resident
            ],
            out_specs=pl.BlockSpec((1, h_out1, w_out1, cout2), lambda n: (n, 0, 0, 0)),
        ),
        compiler_params=pltpu.CompilerParams(
            dimension_semantics=("parallel",),
        ),
    )(x_pad, w_comb, b_comb)

    if stride > 1:
        # TODO(synk): do the strided taps in-kernel instead of subsampling.
        out_nhwc = out_nhwc[:, ::stride, ::stride, :][:, :h_out, :w_out, :]

    out = jnp.transpose(out_nhwc, (0, 3, 1, 2))                       # (N, 2Cout, Ho, Wo)
    real = out[:, :Cout]
    imag = out[:, Cout:]
    return jax.lax.complex(real, imag).astype(jnp.complex64)


def _reference(x, wr, wi, br, bi, *, stride, padding):
    """Pure-XLA reference matching the PyTorch module (cross-correlation, like Conv2d)."""
    def conv(inp, w, b):
        out = jax.lax.conv_general_dilated(
            inp, w,
            window_strides=(stride, stride),
            padding=[(padding, padding), (padding, padding)],
            dimension_numbers=("NCHW", "OIHW", "NCHW"))
        return out + b[None, :, None, None]

    xr = jnp.real(x).astype(jnp.float32)
    xi = jnp.imag(x).astype(jnp.float32)
    real = conv(xr, wr, br) - conv(xi, wi, bi)
    imag = conv(xi, wr, br) + conv(xr, wi, bi)
    return jax.lax.complex(real, imag).astype(jnp.complex64)


def _bf16_exact(a):
    # Round to bf16-representable values so the numerical check is independent of the
    # MXU precision policy (products are then exact in f32 for both kernel and reference).
    return a.astype(jnp.bfloat16).astype(jnp.float32)


if __name__ == "__main__":
    N, Cin, Cout, H, W = 2, 4, 8, 16, 16
    kh = kw = 3
    stride, padding = 1, 1

    key = jax.random.PRNGKey(0)
    k1, k2, k3, k4, k5, k6 = jax.random.split(key, 6)
    xr = _bf16_exact(jax.random.normal(k1, (N, Cin, H, W), jnp.float32))
    xi = _bf16_exact(jax.random.normal(k2, (N, Cin, H, W), jnp.float32))
    x = jax.lax.complex(xr, xi).astype(jnp.complex64)

    scale = 0.1
    wr = _bf16_exact(scale * jax.random.normal(k3, (Cout, Cin, kh, kw), jnp.float32))
    wi = _bf16_exact(scale * jax.random.normal(k4, (Cout, Cin, kh, kw), jnp.float32))
    br = _bf16_exact(scale * jax.random.normal(k5, (Cout,), jnp.float32))
    bi = _bf16_exact(scale * jax.random.normal(k6, (Cout,), jnp.float32))

    out = complex_conv2d(x, wr, wi, br, bi, stride=stride, padding=padding)
    out = jax.block_until_ready(out)

    ref = _reference(x, wr, wi, br, bi, stride=stride, padding=padding)
    assert out.shape == ref.shape == (N, Cout, H, W), (out.shape, ref.shape)
    assert out.dtype == jnp.complex64
    max_err = float(jnp.max(jnp.abs(out - ref)))
    assert jnp.allclose(out, ref, atol=5e-4, rtol=5e-4), f"max |err| = {max_err}"

    print("KERNEL_OK")
</pallas_src>

<mosaic_0001>
module attributes {stable_mosaic.version = 11 : i64} {
  func.func @_cconv_kernel(%arg0: i32, %arg1: memref<1x18x18x8xf32, #tpu.memory_space<vmem>>, %arg2: memref<3x3x8x16xf32, #tpu.memory_space<vmem>>, %arg3: memref<1x16xf32, #tpu.memory_space<vmem>>, %arg4: memref<1x16x16x16xf32, #tpu.memory_space<vmem>>) attributes {dimension_semantics = [#tpu.dimension_semantics<parallel>], iteration_bounds = array<i64: 2>, scalar_prefetch = 0 : i64, scratch_operands = 0 : i64, tpu.core_type = #tpu.core_type<tc>, window_params = [{transform_indices = @transform_0, window_bounds = array<i64: 1, 18, 18, 8>}, {pipeline_mode = #tpu.pipeline_mode<synchronous>, transform_indices = @transform_1, window_bounds = array<i64: 3, 3, 8, 16>}, {pipeline_mode = #tpu.pipeline_mode<synchronous>, transform_indices = @transform_2, window_bounds = array<i64: 1, 16>}, {transform_indices = @transform_3, window_bounds = array<i64: 1, 16, 16, 16>}]} {
    %cst = arith.constant 0.000000e+00 : f32
    %0 = vector.broadcast %cst : f32 to vector<256x16xf32>
    %c0 = arith.constant 0 : index
    %c0_0 = arith.constant 0 : index
    %c0_1 = arith.constant 0 : index
    %c0_2 = arith.constant 0 : index
    %1 = vector.load %arg1[%c0, %c0_0, %c0_1, %c0_2] : memref<1x18x18x8xf32, #tpu.memory_space<vmem>>, vector<1x16x16x8xf32>
    %2 = vector.shape_cast %1 : vector<1x16x16x8xf32> to vector<16x16x8xf32>
    %3 = vector.shape_cast %2 : vector<16x16x8xf32> to vector<256x8xf32>
    %c0_3 = arith.constant 0 : index
    %c0_4 = arith.constant 0 : index
    %c0_5 = arith.constant 0 : index
    %c0_6 = arith.constant 0 : index
    %4 = vector.load %arg2[%c0_3, %c0_4, %c0_5, %c0_6] : memref<3x3x8x16xf32, #tpu.memory_space<vmem>>, vector<1x1x8x16xf32>
    %5 = vector.shape_cast %4 : vector<1x1x8x16xf32> to vector<8x16xf32>
    %cst_7 = arith.constant dense<0.000000e+00> : vector<256x16xf32>
    %6 = tpu.matmul %3, %5, %cst_7 {dimension_numbers = #tpu.dot_dimension_numbers<[1], [0], [0], [1], [0, 0, 1, 1], [], []>} : vector<256x8xf32>, vector<8x16xf32>, vector<256x16xf32> -> vector<256x16xf32>
    %7 = arith.addf %0, %6 : vector<256x16xf32>
    %c0_8 = arith.constant 0 : index
    %c0_9 = arith.constant 0 : index
    %c1 = arith.constant 1 : index
    %c0_10 = arith.constant 0 : index
    %8 = vector.load %arg1[%c0_8, %c0_9, %c1, %c0_10] : memref<1x18x18x8xf32, #tpu.memory_space<vmem>>, vector<1x16x16x8xf32>
    %9 = vector.shape_cast %8 : vector<1x16x16x8xf32> to vector<16x16x8xf32>
    %10 = vector.shape_cast %9 : vector<16x16x8xf32> to vector<256x8xf32>
    %c0_11 = arith.constant 0 : index
    %c1_12 = arith.constant 1 : index
    %c0_13 = arith.constant 0 : index
    %c0_14 = arith.constant 0 : index
    %11 = vector.load %arg2[%c0_11, %c1_12, %c0_13, %c0_14] : memref<3x3x8x16xf32, #tpu.memory_space<vmem>>, vector<1x1x8x16xf32>
    %12 = vector.shape_cast %11 : vector<1x1x8x16xf32> to vector<8x16xf32>
    %cst_15 = arith.constant dense<0.000000e+00> : vector<256x16xf32>
    %13 = tpu.matmul %10, %12, %cst_15 {dimension_numbers = #tpu.dot_dimension_numbers<[1], [0], [0], [1], [0, 0, 1, 1], [], []>} : vector<256x8xf32>, vector<8x16xf32>, vector<256x16xf32> -> vector<256x16xf32>
    %14 = arith.addf %7, %13 : vector<256x16xf32>
    %c0_16 = arith.constant 0 : index
    %c0_17 = arith.constant 0 : index
    %c2 = arith.constant 2 : index
    %c0_18 = arith.constant 0 : index
    %15 = vector.load %arg1[%c0_16, %c0_17, %c2, %c0_18] : memref<1x18x18x8xf32, #tpu.memory_space<vmem>>, vector<1x16x16x8xf32>
    %16 = vector.shape_cast %15 : vector<1x16x16x8xf32> to vector<16x16x8xf32>
    %17 = vector.shape_cast %16 : vector<16x16x8xf32> to vector<256x8xf32>
    %c0_19 = arith.constant 0 : index
    %c2_20 = arith.constant 2 : index
    %c0_21 = arith.constant 0 : index
    %c0_22 = arith.constant 0 : index
    %18 = vector.load %arg2[%c0_19, %c2_20, %c0_21, %c0_22] : memref<3x3x8x16xf32, #tpu.memory_space<vmem>>, vector<1x1x8x16xf32>
    %19 = vector.shape_cast %18 : vector<1x1x8x16xf32> to vector<8x16xf32>
    %cst_23 = arith.constant dense<0.000000e+00> : vector<256x16xf32>
    %20 = tpu.matmul %17, %19, %cst_23 {dimension_numbers = #tpu.dot_dimension_numbers<[1], [0], [0], [1], [0, 0, 1, 1], [], []>} : vector<256x8xf32>, vector<8x16xf32>, vector<256x16xf32> -> vector<256x16xf32>
    %21 = arith.addf %14, %20 : vector<256x16xf32>
    %c0_24 = arith.constant 0 : index
    %c1_25 = arith.constant 1 : index
    %c0_26 = arith.constant 0 : index
    %c0_27 = arith.constant 0 : index
    %22 = vector.load %arg1[%c0_24, %c1_25, %c0_26, %c0_27] : memref<1x18x18x8xf32, #tpu.memory_space<vmem>>, vector<1x16x16x8xf32>
    %23 = vector.shape_cast %22 : vector<1x16x16x8xf32> to vector<16x16x8xf32>
    %24 = vector.shape_cast %23 : vector<16x16x8xf32> to vector<256x8xf32>
    %c1_28 = arith.constant 1 : index
    %c0_29 = arith.constant 0 : index
    %c0_30 = arith.constant 0 : index
    %c0_31 = arith.constant 0 : index
    %25 = vector.load %arg2[%c1_28, %c0_29, %c0_30, %c0_31] : memref<3x3x8x16xf32, #tpu.memory_space<vmem>>, vector<1x1x8x16xf32>
    %26 = vector.shape_cast %25 : vector<1x1x8x16xf32> to vector<8x16xf32>
    %cst_32 = arith.constant dense<0.000000e+00> : vector<256x16xf32>
    %27 = tpu.matmul %24, %26, %cst_32 {dimension_numbers = #tpu.dot_dimension_numbers<[1], [0], [0], [1], [0, 0, 1, 1], [], []>} : vector<256x8xf32>, vector<8x16xf32>, vector<256x16xf32> -> vector<256x16xf32>
    %28 = arith.addf %21, %27 : vector<256x16xf32>
    %c0_33 = arith.constant 0 : index
    %c1_34 = arith.constant 1 : index
    %c1_35 = arith.constant 1 : index
    %c0_36 = arith.constant 0 : index
    %29 = vector.load %arg1[%c0_33, %c1_34, %c1_35, %c0_36] : memref<1x18x18x8xf32, #tpu.memory_space<vmem>>, vector<1x16x16x8xf32>
    %30 = vector.shape_cast %29 : vector<1x16x16x8xf32> to vector<16x16x8xf32>
    %31 = vector.shape_cast %30 : vector<16x16x8xf32> to vector<256x8xf32>
    %c1_37 = arith.constant 1 : index
    %c1_38 = arith.constant 1 : index
    %c0_39 = arith.constant 0 : index
    %c0_40 = arith.constant 0 : index
    %32 = vector.load %arg2[%c1_37, %c1_38, %c0_39, %c0_40] : memref<3x3x8x16xf32, #tpu.memory_space<vmem>>, vector<1x1x8x16xf32>
    %33 = vector.shape_cast %32 : vector<1x1x8x16xf32> to vector<8x16xf32>
    %cst_41 = arith.constant dense<0.000000e+00> : vector<256x16xf32>
    %34 = tpu.matmul %31, %33, %cst_41 {dimension_numbers = #tpu.dot_dimension_numbers<[1], [0], [0], [1], [0, 0, 1, 1], [], []>} : vector<256x8xf32>, vector<8x16xf32>, vector<256x16xf32> -> vector<256x16xf32>
    %35 = arith.addf %28, %34 : vector<256x16xf32>
    %c0_42 = arith.constant 0 : index
    %c1_43 = arith.constant 1 : index
    %c2_44 = arith.constant 2 : index
    %c0_45 = arith.constant 0 : index
    %36 = vector.load %arg1[%c0_42, %c1_43, %c2_44, %c0_45] : memref<1x18x18x8xf32, #tpu.memory_space<vmem>>, vector<1x16x16x8xf32>
    %37 = vector.shape_cast %36 : vector<1x16x16x8xf32> to vector<16x16x8xf32>
    %38 = vector.shape_cast %37 : vector<16x16x8xf32> to vector<256x8xf32>
    %c1_46 = arith.constant 1 : index
    %c2_47 = arith.constant 2 : index
    %c0_48 = arith.constant 0 : index
    %c0_49 = arith.constant 0 : index
    %39 = vector.load %arg2[%c1_46, %c2_47, %c0_48, %c0_49] : memref<3x3x8x16xf32, #tpu.memory_space<vmem>>, vector<1x1x8x16xf32>
    %40 = vector.shape_cast %39 : vector<1x1x8x16xf32> to vector<8x16xf32>
    %cst_50 = arith.constant dense<0.000000e+00> : vector<256x16xf32>
    %41 = tpu.matmul %38, %40, %cst_50 {dimension_numbers = #tpu.dot_dimension_numbers<[1], [0], [0], [1], [0, 0, 1, 1], [], []>} : vector<256x8xf32>, vector<8x16xf32>, vector<256x16xf32> -> vector<256x16xf32>
    %42 = arith.addf %35, %41 : vector<256x16xf32>
    %c0_51 = arith.constant 0 : index
    %c2_52 = arith.constant 2 : index
    %c0_53 = arith.constant 0 : index
    %c0_54 = arith.constant 0 : index
    %43 = vector.load %arg1[%c0_51, %c2_52, %c0_53, %c0_54] : memref<1x18x18x8xf32, #tpu.memory_space<vmem>>, vector<1x16x16x8xf32>
    %44 = vector.shape_cast %43 : vector<1x16x16x8xf32> to vector<16x16x8xf32>
    %45 = vector.shape_cast %44 : vector<16x16x8xf32> to vector<256x8xf32>
    %c2_55 = arith.constant 2 : index
    %c0_56 = arith.constant 0 : index
    %c0_57 = arith.constant 0 : index
    %c0_58 = arith.constant 0 : index
    %46 = vector.load %arg2[%c2_55, %c0_56, %c0_57, %c0_58] : memref<3x3x8x16xf32, #tpu.memory_space<vmem>>, vector<1x1x8x16xf32>
    %47 = vector.shape_cast %46 : vector<1x1x8x16xf32> to vector<8x16xf32>
    %cst_59 = arith.constant dense<0.000000e+00> : vector<256x16xf32>
    %48 = tpu.matmul %45, %47, %cst_59 {dimension_numbers = #tpu.dot_dimension_numbers<[1], [0], [0], [1], [0, 0, 1, 1], [], []>} : vector<256x8xf32>, vector<8x16xf32>, vector<256x16xf32> -> vector<256x16xf32>
    %49 = arith.addf %42, %48 : vector<256x16xf32>
    %c0_60 = arith.constant 0 : index
    %c2_61 = arith.constant 2 : index
    %c1_62 = arith.constant 1 : index
    %c0_63 = arith.constant 0 : index
    %50 = vector.load %arg1[%c0_60, %c2_61, %c1_62, %c0_63] : memref<1x18x18x8xf32, #tpu.memory_space<vmem>>, vector<1x16x16x8xf32>
    %51 = vector.shape_cast %50 : vector<1x16x16x8xf32> to vector<16x16x8xf32>
    %52 = vector.shape_cast %51 : vector<16x16x8xf32> to vector<256x8xf32>
    %c2_64 = arith.constant 2 : index
    %c1_65 = arith.constant 1 : index
    %c0_66 = arith.constant 0 : index
    %c0_67 = arith.constant 0 : index
    %53 = vector.load %arg2[%c2_64, %c1_65, %c0_66, %c0_67] : memref<3x3x8x16xf32, #tpu.memory_space<vmem>>, vector<1x1x8x16xf32>
    %54 = vector.shape_cast %53 : vector<1x1x8x16xf32> to vector<8x16xf32>
    %cst_68 = arith.constant dense<0.000000e+00> : vector<256x16xf32>
    %55 = tpu.matmul %52, %54, %cst_68 {dimension_numbers = #tpu.dot_dimension_numbers<[1], [0], [0], [1], [0, 0, 1, 1], [], []>} : vector<256x8xf32>, vector<8x16xf32>, vector<256x16xf32> -> vector<256x16xf32>
    %56 = arith.addf %49, %55 : vector<256x16xf32>
    %c0_69 = arith.constant 0 : index
    %c2_70 = arith.constant 2 : index
    %c2_71 = arith.constant 2 : index
    %c0_72 = arith.constant 0 : index
    %57 = vector.load %arg1[%c0_69, %c2_70, %c2_71, %c0_72] : memref<1x18x18x8xf32, #tpu.memory_space<vmem>>, vector<1x16x16x8xf32>
    %58 = vector.shape_cast %57 : vector<1x16x16x8xf32> to vector<16x16x8xf32>
    %59 = vector.shape_cast %58 : vector<16x16x8xf32> to vector<256x8xf32>
    %c2_73 = arith.constant 2 : index
    %c2_74 = arith.constant 2 : index
    %c0_75 = arith.constant 0 : index
    %c0_76 = arith.constant 0 : index
    %60 = vector.load %arg2[%c2_73, %c2_74, %c0_75, %c0_76] : memref<3x3x8x16xf32, #tpu.memory_space<vmem>>, vector<1x1x8x16xf32>
    %61 = vector.shape_cast %60 : vector<1x1x8x16xf32> to vector<8x16xf32>
    %cst_77 = arith.constant dense<0.000000e+00> : vector<256x16xf32>
    %62 = tpu.matmul %59, %61, %cst_77 {dimension_numbers = #tpu.dot_dimension_numbers<[1], [0], [0], [1], [0, 0, 1, 1], [], []>} : vector<256x8xf32>, vector<8x16xf32>, vector<256x16xf32> -> vector<256x16xf32>
    %63 = arith.addf %56, %62 : vector<256x16xf32>
    %c0_78 = arith.constant 0 : index
    %c0_79 = arith.constant 0 : index
    %64 = vector.load %arg3[%c0_78, %c0_79] : memref<1x16xf32, #tpu.memory_space<vmem>>, vector<1x16xf32>
    %65 = vector.broadcast %64 : vector<1x16xf32> to vector<256x16xf32>
    %66 = arith.addf %63, %65 : vector<256x16xf32>
    %67 = vector.shape_cast %66 : vector<256x16xf32> to vector<16x16x16xf32>
    %c0_80 = arith.constant 0 : index
    %c0_81 = arith.constant 0 : index
    %c0_82 = arith.constant 0 : index
    %c0_83 = arith.constant 0 : index
    %68 = vector.load %arg4[%c0_80, %c0_81, %c0_82, %c0_83] : memref<1x16x16x16xf32, #tpu.memory_space<vmem>>, vector<1x16x16x16xf32>
    %69 = vector.shape_cast %68 : vector<1x16x16x16xf32> to vector<16x16x16xf32>
    %70 = vector.shape_cast %67 : vector<16x16x16xf32> to vector<1x16x16x16xf32>
    tpu.vector_store %arg4[%c0_80, %c0_81, %c0_82, %c0_83], %70 {strides = array<i32>} : memref<1x16x16x16xf32, #tpu.memory_space<vmem>>, vector<1x16x16x16xf32>,
    return
  }
  func.func @transform_0(%arg0: i32) -> (i32, i32, i32, i32) {
    %c0_i32 = arith.constant 0 : i32
    %c0_i32_0 = arith.constant 0 : i32
    %c0_i32_1 = arith.constant 0 : i32
    %c0_i32_2 = arith.constant 0 : i32
    return %arg0, %c0_i32, %c0_i32_0, %c0_i32_1 : i32, i32, i32, i32
  }
  func.func @transform_1(%arg0: i32) -> (i32, i32, i32, i32) {
    %c0_i32 = arith.constant 0 : i32
    %c0_i32_0 = arith.constant 0 : i32
    %c0_i32_1 = arith.constant 0 : i32
    %c0_i32_2 = arith.constant 0 : i32
    %c0_i32_3 = arith.constant 0 : i32
    return %c0_i32, %c0_i32_0, %c0_i32_1, %c0_i32_2 : i32, i32, i32, i32
  }
  func.func @transform_2(%arg0: i32) -> (i32, i32) {
    %c0_i32 = arith.constant 0 : i32
    %c0_i32_0 = arith.constant 0 : i32
    %c0_i32_1 = arith.constant 0 : i32
    return %c0_i32, %c0_i32_0 : i32, i32
  }
  func.func @transform_3(%arg0: i32) -> (i32, i32, i32, i32) {
    %c0_i32 = arith.constant 0 : i32
    %c0_i32_0 = arith.constant 0 : i32
    %c0_i32_1 = arith.constant 0 : i32
    %c0_i32_2 = arith.constant 0 : i32
    return %arg0, %c0_i32, %c0_i32_0, %c0_i32_1 : i32, i32, i32, i32
  }
}

</mosaic_0001>

<llo_original>
// kernel: tpu_custom_call.1
$region0: #{tpu_custom_call.1}
  #allocation0 [shape = 'u32[]', space=smem, size = 0x4, offset = 0x4, fixed_abs, tag = 'smem constant byte address 0x4 - core index']
  #allocation1 [shape = 'u32[72,128]{1,0:T(1,128)}', space=vmem, size = 0x9000, scoped, tag = 'internal scratch']
  %s0 = inlined_call_operand.vmem [shape: f32[2,18,18,8], index: 0, kind: input, shape index: {}]
  %s1 = inlined_call_operand.vmem [shape: f32[3,3,8,16], index: 1, kind: input, shape index: {}]
  %s2 = inlined_call_operand.vmem [shape: f32[1,16], index: 2, kind: input, shape index: {}]
  %s3 = inlined_call_operand.hbm [shape: f32[2,16,16,16], index: 3, kind: output, shape index: {}]
  %s4 = sld [smem:[#allocation0]]
  $region45: #{tpu_custom_call.1} parent=0
    _
  %s6 = ssub.s32 1, %s4
  %s7 = scalar_select 0, %s6, %s4
  $region1: #{tpu_custom_call.1} parent=0
    #allocation2 [shape = 'u8[262144]{0}', space=vmem, size = 0x40000, scoped, tag = 'output window, operand 0']
    #allocation3 [shape = 's32[2]{0}', space=sflag, size = 0x8, scoped, tag = 'scoped memory for tpu_custom_call.1']
    %8 = vsyncpa [#allocation3], 0
    %s9 = scalar_lea.sflag [#allocation3], 1
    %10 = vsyncpa %s9, 0
    loop: start=0, step=1, limit=4
    $region2: #{tpu_custom_call.1} parent=1 // loop_pre_header
      _
    $region3: #{tpu_custom_call.1} parent=1 // loop_header
      %s12 = sphi 0, %s16
      %p13 = scmp.ge.s32.totalorder %s12, 4
      %s22 = sphi 0, %s24
      %s25 = sphi 0, %s22
      %s26 = sphi 0, %s25
      %s42 = sphi 0, %s26
      %s46 = sphi 0, %s46
      %s48 = sphi 0, %s46
      %s49 = sphi 0, %s48
      %s63 = sphi 0, %s49
      %s67 = sphi 0, %s67
      %s69 = sphi 0, %s67
      %s70 = sphi 0, %s69
      %s84 = sphi 0, %s70
      %s90 = sphi 0, %s92
      %s93 = sphi 0, %s90
      %s94 = sphi 0, %s93
      %s110 = sphi 0, %s94
    $region4: #{tpu_custom_call.1} parent=1 // loop_header_branch
      %15 = sbr.rel (%p13) target = $region8
    $region5: #{tpu_custom_call.1} parent=1 // loop_body
      %s17 = ssub.s32 %s12, 1
      %s18 = ssub.s32 %s12, 2
      %s19 = sadd.s32 %s12, 1
      %s20 = ssub.s32 %s12, %s19
      %p21 = scmp.eq.s32.totalorder %s20, 0
      %s23 = sadd.s32 %s22, 1
      %s24 = scalar_select %p21, %s22, %s23
      %p27 = pneg %p21
      %p28 = scmp.eq.s32.totalorder %s12, 1
      %p29 = por %p27, %p28
      %p30 = scmp.ne.s32.totalorder %s22, %s25
      %p31 = scmp.eq.s32.totalorder %s12, 0
      %p32 = por %p30, %p31
      %p33 = scmp.ne.s32.totalorder %s22, %s25
      %p34 = scmp.eq.s32.totalorder %s17, 1
      %p35 = por %p33, %p34
      %p36 = scmp.ne.s32.totalorder %s25, %s26
      %p37 = scmp.eq.s32.totalorder %s17, 0
      %p38 = por %p36, %p37
      %p39 = scmp.ne.s32.totalorder %s25, %s26
      %p40 = scmp.eq.s32.totalorder %s18, 1
      %p41 = por %p39, %p40
      %p43 = scmp.ne.s32.totalorder %s26, %s42
      %p44 = scmp.eq.s32.totalorder %s18, 0
      %p45 = por %p43, %p44
      %s47 = sadd.s32 %s46, 1
      %p50 = scmp.eq.s32.totalorder %s12, 1
      %p51 = scmp.ne.s32.totalorder %s46, %s48
      %p52 = scmp.eq.s32.totalorder %s12, 0
      %p53 = por %p51, %p52
      %p54 = scmp.ne.s32.totalorder %s46, %s48
      %p55 = scmp.eq.s32.totalorder %s17, 1
      %p56 = por %p54, %p55
      %p57 = scmp.ne.s32.totalorder %s48, %s49
      %p58 = scmp.eq.s32.totalorder %s17, 0
      %p59 = por %p57, %p58
      %p60 = scmp.ne.s32.totalorder %s48, %s49
      %p61 = scmp.eq.s32.totalorder %s18, 1
      %p62 = por %p60, %p61
      %p64 = scmp.ne.s32.totalorder %s49, %s63
      %p65 = scmp.eq.s32.totalorder %s18, 0
      %p66 = por %p64, %p65
      %s68 = sadd.s32 %s67, 1
      %p71 = scmp.eq.s32.totalorder %s12, 1
      %p72 = scmp.ne.s32.totalorder %s67, %s69
      %p73 = scmp.eq.s32.totalorder %s12, 0
      %p74 = por %p72, %p73
      %p75 = scmp.ne.s32.totalorder %s67, %s69
      %p76 = scmp.eq.s32.totalorder %s17, 1
      %p77 = por %p75, %p76
      %p78 = scmp.ne.s32.totalorder %s69, %s70
      %p79 = scmp.eq.s32.totalorder %s17, 0
      %p80 = por %p78, %p79
      %p81 = scmp.ne.s32.totalorder %s69, %s70
      %p82 = scmp.eq.s32.totalorder %s18, 1
      %p83 = por %p81, %p82
      %p85 = scmp.ne.s32.totalorder %s70, %s84
      %p86 = scmp.eq.s32.totalorder %s18, 0
      %p87 = por %p85, %p86
      %s88 = ssub.s32 %s12, %s19
      %p89 = scmp.eq.s32.totalorder %s88, 0
      %s91 = sadd.s32 %s90, 1
      %s92 = scalar_select %p89, %s90, %s91
      %p95 = pneg %p89
      %p96 = scmp.eq.s32.totalorder %s12, 1
      %p97 = por %p95, %p96
      %p98 = scmp.ne.s32.totalorder %s90, %s93
      %p99 = scmp.eq.s32.totalorder %s12, 0
      %p100 = por %p98, %p99
      %p101 = scmp.ne.s32.totalorder %s90, %s93
      %p102 = scmp.eq.s32.totalorder %s17, 1
      %p103 = por %p101, %p102
      %p104 = scmp.ne.s32.totalorder %s93, %s94
      %p105 = scmp.eq.s32.totalorder %s17, 0
      %p106 = por %p104, %p105
      %p107 = scmp.ne.s32.totalorder %s93, %s94
      %p108 = scmp.eq.s32.totalorder %s18, 1
      %p109 = por %p107, %p108
      %p111 = scmp.ne.s32.totalorder %s94, %s110
      %p112 = scmp.eq.s32.totalorder %s18, 0
      %p113 = por %p111, %p112
      %p114 = scmp.le.s32.totalorder 1, %s12
      %p115 = scmp.lt.s32.totalorder %s12, 3
      %p116 = pnand %p114, %p115
      %p117 = pneg %p116
      // Predicated region
      $region9: #{tpu_custom_call.1} parent=5 // pred_check
        _
      $region10: #{tpu_custom_call.1} parent=5 // pred_check_branch
        %119 = sbr.rel (%p116) target = $region12
      $region11: #{tpu_custom_call.1} parent=5 // pred_region
        %s120 = ssub.s32 %s12, 1
        // Predicated region
        $region13: #{tpu_custom_call.1} parent=11 // pred_check
          %p121 = pneg %p59
        $region14: #{tpu_custom_call.1} parent=11 // pred_check_branch
          %123 = sbr.rel (%p121) target = $region16
        $region15: #{tpu_custom_call.1} parent=11 // pred_region
          _
        $region16: #{tpu_custom_call.1} parent=11 // pred_fallthru
          _
        // Predicated region
        $region17: #{tpu_custom_call.1} parent=11 // pred_check
          %p124 = pneg %p80
        $region18: #{tpu_custom_call.1} parent=11 // pred_check_branch
          %126 = sbr.rel (%p124) target = $region20
        $region19: #{tpu_custom_call.1} parent=11 // pred_region
          _
        $region20: #{tpu_custom_call.1} parent=11 // pred_fallthru
          _
      $region12: #{tpu_custom_call.1} parent=5 // pred_fallthru
        _
      %p127 = scmp.lt.s32.totalorder %s12, 2
      // Predicated region
      $region21: #{tpu_custom_call.1} parent=5 // pred_check
        %p128 = pneg %p127
      $region22: #{tpu_custom_call.1} parent=5 // pred_check_branch
        %130 = sbr.rel (%p128) target = $region24
      $region23: #{tpu_custom_call.1} parent=5 // pred_region
        // Predicated region
        $region25: #{tpu_custom_call.1} parent=23 // pred_check
          %p131 = pneg %p32
        $region26: #{tpu_custom_call.1} parent=23 // pred_check_branch
          %133 = sbr.rel (%p131) target = $region28
        $region27: #{tpu_custom_call.1} parent=23 // pred_region
          %p134 = scmp.lt.s32.totalorder %s12, 1
          %s135 = scalar_select %p134, %s12, 1
          %s136 = smul.addr %s135, 54
          %s137 = smul.addr %s136, 8
          %s138 = scalar_lea.vmem %s0, %s137
        $region28: #{tpu_custom_call.1} parent=23 // pred_fallthru
          _
      $region24: #{tpu_custom_call.1} parent=5 // pred_fallthru
        _
      %p139 = scmp.le.s32.totalorder 1, %s12
      %p140 = scmp.lt.s32.totalorder %s12, 3
      %p141 = pnand %p139, %p140
      %p142 = pneg %p141
      // Predicated region
      $region29: #{tpu_custom_call.1} parent=5 // pred_check
        _
      $region30: #{tpu_custom_call.1} parent=5 // pred_check_branch
        %144 = sbr.rel (%p141) target = $region32
      $region31: #{tpu_custom_call.1} parent=5 // pred_region
        %s145 = ssub.s32 %s12, 1
        %p146 = scmp.lt.s32.totalorder %s17, 1
        %s147 = scalar_select %p146, %s17, 1
        %s148 = smul.addr %s147, 54
        %s149 = smul.addr %s148, 8
        %s150 = scalar_lea.vmem %s0, %s149
        %p151 = pneg %p38
        %p152 = pneg %p35
        %p153 = pneg %p59
        %p154 = pneg %p56
        %p155 = pneg %p80
        %p156 = pneg %p77
        %p157 = pneg %p106
        %p158 = pneg %p103
        %s159 = sand.u32 %s93, 1
        %s160 = scalar_lea.sflag [#allocation3], %s159
        %s161 = sand.u32 %s93, 1
        %s162 = smul.addr %s161, 256
        %s163 = scalar_lea.vmem [#allocation2], %s162
        %p164 = scmp.lt.s32.totalorder %s17, 1
        %s165 = scalar_select %p164, %s17, 1
        %s166 = smul.addr %s165, 54
        %s167 = smul.addr %s166, 8
        %s168 = scalar_lea.vmem %s0, %s167
        %v169 = vld [vmem:[%s168] sm:$0xff]
        %v170 = vld [vmem:[%s168 + $0x8] sm:$0xff]
        %v171 = vld [vmem:[%s168 + $0x18] sm:$0xff]
        %v172 = vld [vmem:[%s168 + $0x20] sm:$0xff]
        %v173 = vld [vmem:[%s168 + $0x30] sm:$0xff]
        %v174 = vld [vmem:[%s168 + $0x38] sm:$0xff]
        %v175 = vld [vmem:[%s168 + $0x48] sm:$0xff]
        %v176 = vld [vmem:[%s168 + $0x50] sm:$0xff]
        %v177 = vld [vmem:[%s168 + $0x60] sm:$0xff]
        %v178 = vld [vmem:[%s168 + $0x68] sm:$0xff]
        %v179 = vld [vmem:[%s168 + $0x78] sm:$0xff]
        %v180 = vld [vmem:[%s168 + $0x80] sm:$0xff]
        %v181 = vld [vmem:[%s168 + $0x90] sm:$0xff]
        %v182 = vld [vmem:[%s168 + $0x98] sm:$0xff]
        %v183 = vld [vmem:[%s168 + $0xa8] sm:$0xff]
        %v184 = vld [vmem:[%s168 + $0xb0] sm:$0xff]
        %v185 = vld [vmem:[%s168 + $0xc0] sm:$0xff]
        %v186 = vld [vmem:[%s168 + $0xc8] sm:$0xff]
        %v187 = vld [vmem:[%s168 + $0xd8] sm:$0xff]
        %v188 = vld [vmem:[%s168 + $0xe0] sm:$0xff]
        %v189 = vld [vmem:[%s168 + $0xf0] sm:$0xff]
        %v190 = vld [vmem:[%s168 + $0xf8] sm:$0xff]
        %v191 = vld [vmem:[%s168 + $0x108] sm:$0xff]
        %v192 = vld [vmem:[%s168 + $0x110] sm:$0xff]
        %v193 = vld [vmem:[%s168 + $0x120] sm:$0xff]
        %v194 = vld [vmem:[%s168 + $0x128] sm:$0xff]
        %v195 = vld [vmem:[%s168 + $0x138] sm:$0xff]
        %v196 = vld [vmem:[%s168 + $0x140] sm:$0xff]
        %v197 = vld [vmem:[%s168 + $0x150] sm:$0xff]
        %v198 = vld [vmem:[%s168 + $0x158] sm:$0xff]
        %v199 = vld [vmem:[%s168 + $0x168] sm:$0xff]
        %v200 = vld [vmem:[%s168 + $0x170] sm:$0xff]
        %v201 = vld [vmem:[%s1] sm:$0xff]
        %v202 = vld [vmem:[%s168 + $0x1] sm:$0xff]
        %v203 = vld [vmem:[%s168 + $0x9] sm:$0xff]
        %v204 = vld [vmem:[%s168 + $0x19] sm:$0xff]
        %v205 = vld [vmem:[%s168 + $0x21] sm:$0xff]
        %v206 = vld [vmem:[%s168 + $0x31] sm:$0xff]
        %v207 = vld [vmem:[%s168 + $0x39] sm:$0xff]
        %v208 = vld [vmem:[%s168 + $0x49] sm:$0xff]
        %v209 = vld [vmem:[%s168 + $0x51] sm:$0xff]
        %v210 = vld [vmem:[%s168 + $0x61] sm:$0xff]
        %v211 = vld [vmem:[%s168 + $0x69] sm:$0xff]
        %v212 = vld [vmem:[%s168 + $0x79] sm:$0xff]
        %v213 = vld [vmem:[%s168 + $0x81] sm:$0xff]
        %v214 = vld [vmem:[%s168 + $0x91] sm:$0xff]
        %v215 = vld [vmem:[%s168 + $0x99] sm:$0xff]
        %v216 = vld [vmem:[%s168 + $0xa9] sm:$0xff]
        %v217 = vld [vmem:[%s168 + $0xb1] sm:$0xff]
        %v218 = vld [vmem:[%s168 + $0xc1] sm:$0xff]
        %v219 = vld [vmem:[%s168 + $0xc9] sm:$0xff]
        %v220 = vld [vmem:[%s168 + $0xd9] sm:$0xff]
        %v221 = vld [vmem:[%s168 + $0xe1] sm:$0xff]
        %v222 = vld [vmem:[%s168 + $0xf1] sm:$0xff]
        %v223 = vld [vmem:[%s168 + $0xf9] sm:$0xff]
        %v224 = vld [vmem:[%s168 + $0x109] sm:$0xff]
        %v225 = vld [vmem:[%s168 + $0x111] sm:$0xff]
        %v226 = vld [vmem:[%s168 + $0x121] sm:$0xff]
        %v227 = vld [vmem:[%s168 + $0x129] sm:$0xff]
        %v228 = vld [vmem:[%s168 + $0x139] sm:$0xff]
        %v229 = vld [vmem:[%s168 + $0x141] sm:$0xff]
        %v230 = vld [vmem:[%s168 + $0x151] sm:$0xff]
        %v231 = vld [vmem:[%s168 + $0x159] sm:$0xff]
        %v232 = vld [vmem:[%s168 + $0x169] sm:$0xff]
        %v233 = vld [vmem:[%s168 + $0x171] sm:$0xff]
        %s234 = scalar_lea.vmem %s1, 8
        %v235 = vld [vmem:[%s234] sm:$0xff]
        %vm236 = vcmask 64512
        %v238 = vsel %vm236, %v202, 0
        %v241 = vsel %vm236, %v203, 0
        %v244 = vsel %vm236, %v204, 0
        %v247 = vsel %vm236, %v205, 0
        %v250 = vsel %vm236, %v206, 0
        %v253 = vsel %vm236, %v207, 0
        %v256 = vsel %vm236, %v208, 0
        %v259 = vsel %vm236, %v209, 0
        %v262 = vsel %vm236, %v210, 0
        %v265 = vsel %vm236, %v211, 0
        %v268 = vsel %vm236, %v212, 0
        %v271 = vsel %vm236, %v213, 0
        %v274 = vsel %vm236, %v214, 0
        %v277 = vsel %vm236, %v215, 0
        %v280 = vsel %vm236, %v216, 0
        %v283 = vsel %vm236, %v217, 0
        %v286 = vsel %vm236, %v218, 0
        %v289 = vsel %vm236, %v219, 0
        %v292 = vsel %vm236, %v220, 0
        %v295 = vsel %vm236, %v221, 0
        %v298 = vsel %vm236, %v222, 0
        %v301 = vsel %vm236, %v223, 0
        %v304 = vsel %vm236, %v224, 0
        %v307 = vsel %vm236, %v225, 0
        %v310 = vsel %vm236, %v226, 0
        %v313 = vsel %vm236, %v227, 0
        %v316 = vsel %vm236, %v228, 0
        %v319 = vsel %vm236, %v229, 0
        %v322 = vsel %vm236, %v230, 0
        %v325 = vsel %vm236, %v231, 0
        %v328 = vsel %vm236, %v232, 0
        %v331 = vsel %vm236, %v233, 0
        %333 = vmatpush.msra.mxu0 0.0
        %334 = vmatpush.msra.mxu0 0.0
        %335 = vmatpush.msra.mxu0 0.0
        %336 = vmatpush.msra.mxu0 0.0
        %337 = vmatpush.msra.mxu0 0.0
        %338 = vmatpush.msra.mxu0 0.0
        %339 = vmatpush.msra.mxu0 0.0
        %340 = vmatpush.msra.mxu0 0.0
        %341 = vmatpush.msra.mxu0 0.0
        %342 = vmatpush.msra.mxu0 0.0
        %343 = vmatpush.msra.mxu0 0.0
        %344 = vmatpush.msra.mxu0 0.0
        %345 = vmatpush.msra.mxu0 0.0
        %346 = vmatpush.msra.mxu0 0.0
        %347 = vmatpush.msra.mxu0 0.0
        %348 = vmatpush.msra.mxu0 %v235
        %349 = vmatmul.f32.gmra.mxu0 %v238
        %v350 = vpop.f32.mrf.mxu0
        %v351 = vadd.f32 0.0, %v350
        %352 = vmatmul.f32.gmra.mxu0 %v241
        %v353 = vpop.f32.mrf.mxu0
        %v354 = vadd.f32 0.0, %v353
        %355 = vmatmul.f32.gmra.mxu0 %v244
        %v356 = vpop.f32.mrf.mxu0
        %v357 = vadd.f32 0.0, %v356
        %358 = vmatmul.f32.gmra.mxu0 %v247
        %v359 = vpop.f32.mrf.mxu0
        %v360 = vadd.f32 0.0, %v359
        %361 = vmatmul.f32.gmra.mxu0 %v250
        %v362 = vpop.f32.mrf.mxu0
        %v363 = vadd.f32 0.0, %v362
        %364 = vmatmul.f32.gmra.mxu0 %v253
        %v365 = vpop.f32.mrf.mxu0
        %v366 = vadd.f32 0.0, %v365
        %367 = vmatmul.f32.gmra.mxu0 %v256
        %v368 = vpop.f32.mrf.mxu0
        %v369 = vadd.f32 0.0, %v368
        %370 = vmatmul.f32.gmra.mxu0 %v259
        %v371 = vpop.f32.mrf.mxu0
        %v372 = vadd.f32 0.0, %v371
        %373 = vmatmul.f32.gmra.mxu0 %v262
        %v374 = vpop.f32.mrf.mxu0
        %v375 = vadd.f32 0.0, %v374
        %376 = vmatmul.f32.gmra.mxu0 %v265
        %v377 = vpop.f32.mrf.mxu0
        %v378 = vadd.f32 0.0, %v377
        %379 = vmatmul.f32.gmra.mxu0 %v268
        %v380 = vpop.f32.mrf.mxu0
        %v381 = vadd.f32 0.0, %v380
        %382 = vmatmul.f32.gmra.mxu0 %v271
        %v383 = vpop.f32.mrf.mxu0
        %v384 = vadd.f32 0.0, %v383
        %385 = vmatmul.f32.gmra.mxu0 %v274
        %v386 = vpop.f32.mrf.mxu0
        %v387 = vadd.f32 0.0, %v386
        %388 = vmatmul.f32.gmra.mxu0 %v277
        %v389 = vpop.f32.mrf.mxu0
        %v390 = vadd.f32 0.0, %v389
        %391 = vmatmul.f32.gmra.mxu0 %v280
        %v392 = vpop.f32.mrf.mxu0
        %v393 = vadd.f32 0.0, %v392
        %394 = vmatmul.f32.gmra.mxu0 %v283
        %v395 = vpop.f32.mrf.mxu0
        %v396 = vadd.f32 0.0, %v395
        %397 = vmatmul.f32.gmra.mxu0 %v286
        %v398 = vpop.f32.mrf.mxu0
        %v399 = vadd.f32 0.0, %v398
        %400 = vmatmul.f32.gmra.mxu0 %v289
        %v401 = vpop.f32.mrf.mxu0
        %v402 = vadd.f32 0.0, %v401
        %403 = vmatmul.f32.gmra.mxu0 %v292
        %v404 = vpop.f32.mrf.mxu0
        %v405 = vadd.f32 0.0, %v404
        %406 = vmatmul.f32.gmra.mxu0 %v295
        %v407 = vpop.f32.mrf.mxu0
        %v408 = vadd.f32 0.0, %v407
        %409 = vmatmul.f32.gmra.mxu0 %v298
        %v410 = vpop.f32.mrf.mxu0
        %v411 = vadd.f32 0.0, %v410
        %412 = vmatmul.f32.gmra.mxu0 %v301
        %v413 = vpop.f32.mrf.mxu0
        %v414 = vadd.f32 0.0, %v413
        %415 = vmatmul.f32.gmra.mxu0 %v304
        %v416 = vpop.f32.mrf.mxu0
        %v417 = vadd.f32 0.0, %v416
        %418 = vmatmul.f32.gmra.mxu0 %v307
        %v419 = vpop.f32.mrf.mxu0
        %v420 = vadd.f32 0.0, %v419
        %421 = vmatmul.f32.gmra.mxu0 %v310
        %v422 = vpop.f32.mrf.mxu0
        %v423 = vadd.f32 0.0, %v422
        %424 = vmatmul.f32.gmra.mxu0 %v313
        %v425 = vpop.f32.mrf.mxu0
        %v426 = vadd.f32 0.0, %v425
        %427 = vmatmul.f32.gmra.mxu0 %v316
        %v428 = vpop.f32.mrf.mxu0
        %v429 = vadd.f32 0.0, %v428
        %430 = vmatmul.f32.gmra.mxu0 %v319
        %v431 = vpop.f32.mrf.mxu0
        %v432 = vadd.f32 0.0, %v431
        %433 = vmatmul.f32.gmra.mxu0 %v322
        %v434 = vpop.f32.mrf.mxu0
        %v435 = vadd.f32 0.0, %v434
        %436 = vmatmul.f32.gmra.mxu0 %v325
        %v437 = vpop.f32.mrf.mxu0
        %v438 = vadd.f32 0.0, %v437
        %439 = vmatmul.f32.gmra.mxu0 %v328
        %v440 = vpop.f32.mrf.mxu0
        %v441 = vadd.f32 0.0, %v440
        %442 = vmatmul.f32.gmra.mxu0 %v331
        %v443 = vpop.f32.mrf.mxu0
        %v444 = vadd.f32 0.0, %v443
        %445 = vdwg.mxu0
        %v447 = vsel %vm236, %v169, 0
        %v450 = vsel %vm236, %v170, 0
        %v453 = vsel %vm236, %v171, 0
        %v456 = vsel %vm236, %v172, 0
        %v459 = vsel %vm236, %v173, 0
        %v462 = vsel %vm236, %v174, 0
        %v465 = vsel %vm236, %v175, 0
        %v468 = vsel %vm236, %v176, 0
        %v471 = vsel %vm236, %v177, 0
        %v474 = vsel %vm236, %v178, 0
        %v477 = vsel %vm236, %v179, 0
        %v480 = vsel %vm236, %v180, 0
        %v483 = vsel %vm236, %v181, 0
        %v486 = vsel %vm236, %v182, 0
        %v489 = vsel %vm236, %v183, 0
        %v492 = vsel %vm236, %v184, 0
        %v495 = vsel %vm236, %v185, 0
        %v498 = vsel %vm236, %v186, 0
        %v501 = vsel %vm236, %v187, 0
        %v504 = vsel %vm236, %v188, 0
        %v507 = vsel %vm236, %v189, 0
        %v510 = vsel %vm236, %v190, 0
        %v513 = vsel %vm236, %v191, 0
        %v516 = vsel %vm236, %v192, 0
        %v519 = vsel %vm236, %v193, 0
        %v522 = vsel %vm236, %v194, 0
        %v525 = vsel %vm236, %v195, 0
        %v528 = vsel %vm236, %v196, 0
        %v531 = vsel %vm236, %v197, 0
        %v534 = vsel %vm236, %v198, 0
        %v537 = vsel %vm236, %v199, 0
        %v540 = vsel %vm236, %v200, 0
        %542 = vmatpush.msra.mxu0 0.0
        %543 = vmatpush.msra.mxu0 0.0
        %544 = vmatpush.msra.mxu0 0.0
        %545 = vmatpush.msra.mxu0 0.0
        %546 = vmatpush.msra.mxu0 0.0
        %547 = vmatpush.msra.mxu0 0.0
        %548 = vmatpush.msra.mxu0 0.0
        %549 = vmatpush.msra.mxu0 0.0
        %550 = vmatpush.msra.mxu0 0.0
        %551 = vmatpush.msra.mxu0 0.0
        %552 = vmatpush.msra.mxu0 0.0
        %553 = vmatpush.msra.mxu0 0.0
        %554 = vmatpush.msra.mxu0 0.0
        %555 = vmatpush.msra.mxu0 0.0
        %556 = vmatpush.msra.mxu0 0.0
        %557 = vmatpush.msra.mxu0 %v201
        %558 = vmatmul.f32.gmra.mxu0 %v447
        %v559 = vpop.f32.mrf.mxu0
        %v560 = vadd.f32 %v351, %v559
        %561 = vmatmul.f32.gmra.mxu0 %v450
        %v562 = vpop.f32.mrf.mxu0
        %v563 = vadd.f32 %v354, %v562
        %564 = vmatmul.f32.gmra.mxu0 %v453
        %v565 = vpop.f32.mrf.mxu0
        %v566 = vadd.f32 %v357, %v565
        %567 = vmatmul.f32.gmra.mxu0 %v456
        %v568 = vpop.f32.mrf.mxu0
        %v569 = vadd.f32 %v360, %v568
        %570 = vmatmul.f32.gmra.mxu0 %v459
        %v571 = vpop.f32.mrf.mxu0
        %v572 = vadd.f32 %v363, %v571
        %573 = vmatmul.f32.gmra.mxu0 %v462
        %v574 = vpop.f32.mrf.mxu0
        %v575 = vadd.f32 %v366, %v574
        %576 = vmatmul.f32.gmra.mxu0 %v465
        %v577 = vpop.f32.mrf.mxu0
        %v578 = vadd.f32 %v369, %v577
        %579 = vmatmul.f32.gmra.mxu0 %v468
        %v580 = vpop.f32.mrf.mxu0
        %v581 = vadd.f32 %v372, %v580
        %582 = vmatmul.f32.gmra.mxu0 %v471
        %v583 = vpop.f32.mrf.mxu0
        %v584 = vadd.f32 %v375, %v583
        %585 = vmatmul.f32.gmra.mxu0 %v474
        %v586 = vpop.f32.mrf.mxu0
        %v587 = vadd.f32 %v378, %v586
        %588 = vmatmul.f32.gmra.mxu0 %v477
        %v589 = vpop.f32.mrf.mxu0
        %v590 = vadd.f32 %v381, %v589
        %591 = vmatmul.f32.gmra.mxu0 %v480
        %v592 = vpop.f32.mrf.mxu0
        %v593 = vadd.f32 %v384, %v592
        %594 = vmatmul.f32.gmra.mxu0 %v483
        %v595 = vpop.f32.mrf.mxu0
        %v596 = vadd.f32 %v387, %v595
        %597 = vmatmul.f32.gmra.mxu0 %v486
        %v598 = vpop.f32.mrf.mxu0
        %v599 = vadd.f32 %v390, %v598
        %600 = vmatmul.f32.gmra.mxu0 %v489
        %v601 = vpop.f32.mrf.mxu0
        %v602 = vadd.f32 %v393, %v601
        %603 = vmatmul.f32.gmra.mxu0 %v492
        %v604 = vpop.f32.mrf.mxu0
        %v605 = vadd.f32 %v396, %v604
        %606 = vmatmul.f32.gmra.mxu0 %v495
        %v607 = vpop.f32.mrf.mxu0
        %v608 = vadd.f32 %v399, %v607
        %609 = vmatmul.f32.gmra.mxu0 %v498
        %v610 = vpop.f32.mrf.mxu0
        %v611 = vadd.f32 %v402, %v610
        %612 = vmatmul.f32.gmra.mxu0 %v501
        %v613 = vpop.f32.mrf.mxu0
        %v614 = vadd.f32 %v405, %v613
        %615 = vmatmul.f32.gmra.mxu0 %v504
        %v616 = vpop.f32.mrf.mxu0
        %v617 = vadd.f32 %v408, %v616
        %618 = vmatmul.f32.gmra.mxu0 %v507
        %v619 = vpop.f32.mrf.mxu0
        %v620 = vadd.f32 %v411, %v619
        %621 = vmatmul.f32.gmra.mxu0 %v510
        %v622 = vpop.f32.mrf.mxu0
        %v623 = vadd.f32 %v414, %v622
        %624 = vmatmul.f32.gmra.mxu0 %v513
        %v625 = vpop.f32.mrf.mxu0
        %v626 = vadd.f32 %v417, %v625
        %627 = vmatmul.f32.gmra.mxu0 %v516
        %v628 = vpop.f32.mrf.mxu0
        %v629 = vadd.f32 %v420, %v628
        %630 = vmatmul.f32.gmra.mxu0 %v519
        %v631 = vpop.f32.mrf.mxu0
        %v632 = vadd.f32 %v423, %v631
        %633 = vmatmul.f32.gmra.mxu0 %v522
        %v634 = vpop.f32.mrf.mxu0
        %v635 = vadd.f32 %v426, %v634
        %636 = vmatmul.f32.gmra.mxu0 %v525
        %v637 = vpop.f32.mrf.mxu0
        %v638 = vadd.f32 %v429, %v637
        %639 = vmatmul.f32.gmra.mxu0 %v528
        %v640 = vpop.f32.mrf.mxu0
        %v641 = vadd.f32 %v432, %v640
        %642 = vmatmul.f32.gmra.mxu0 %v531
        %v643 = vpop.f32.mrf.mxu0
        %v644 = vadd.f32 %v435, %v643
        %645 = vmatmul.f32.gmra.mxu0 %v534
        %v646 = vpop.f32.mrf.mxu0
        %v647 = vadd.f32 %v438, %v646
        %648 = vmatmul.f32.gmra.mxu0 %v537
        %v649 = vpop.f32.mrf.mxu0
        %v650 = vadd.f32 %v441, %v649
        %651 = vmatmul.f32.gmra.mxu0 %v540
        %v652 = vpop.f32.mrf.mxu0
        %v653 = vadd.f32 %v444, %v652
        %654 = vdwg.mxu0
        %v655 = vld [vmem:[%s168 + $0x2] sm:$0xff]
        %v656 = vld [vmem:[%s168 + $0xa] sm:$0xff]
        %v657 = vld [vmem:[%s168 + $0x1a] sm:$0xff]
        %v658 = vld [vmem:[%s168 + $0x22] sm:$0xff]
        %v659 = vld [vmem:[%s168 + $0x32] sm:$0xff]
        %v660 = vld [vmem:[%s168 + $0x3a] sm:$0xff]
        %v661 = vld [vmem:[%s168 + $0x4a] sm:$0xff]
        %v662 = vld [vmem:[%s168 + $0x52] sm:$0xff]
        %v663 = vld [vmem:[%s168 + $0x62] sm:$0xff]
        %v664 = vld [vmem:[%s168 + $0x6a] sm:$0xff]
        %v665 = vld [vmem:[%s168 + $0x7a] sm:$0xff]
        %v666 = vld [vmem:[%s168 + $0x82] sm:$0xff]
        %v667 = vld [vmem:[%s168 + $0x92] sm:$0xff]
        %v668 = vld [vmem:[%s168 + $0x9a] sm:$0xff]
        %v669 = vld [vmem:[%s168 + $0xaa] sm:$0xff]
        %v670 = vld [vmem:[%s168 + $0xb2] sm:$0xff]
        %v671 = vld [vmem:[%s168 + $0xc2] sm:$0xff]
        %v672 = vld [vmem:[%s168 + $0xca] sm:$0xff]
        %v673 = vld [vmem:[%s168 + $0xda] sm:$0xff]
        %v674 = vld [vmem:[%s168 + $0xe2] sm:$0xff]
        %v675 = vld [vmem:[%s168 + $0xf2] sm:$0xff]
        %v676 = vld [vmem:[%s168 + $0xfa] sm:$0xff]
        %v677 = vld [vmem:[%s168 + $0x10a] sm:$0xff]
        %v678 = vld [vmem:[%s168 + $0x112] sm:$0xff]
        %v679 = vld [vmem:[%s168 + $0x122] sm:$0xff]
        %v680 = vld [vmem:[%s168 + $0x12a] sm:$0xff]
        %v681 = vld [vmem:[%s168 + $0x13a] sm:$0xff]
        %v682 = vld [vmem:[%s168 + $0x142] sm:$0xff]
        %v683 = vld [vmem:[%s168 + $0x152] sm:$0xff]
        %v684 = vld [vmem:[%s168 + $0x15a] sm:$0xff]
        %v685 = vld [vmem:[%s168 + $0x16a] sm:$0xff]
        %v686 = vld [vmem:[%s168 + $0x172] sm:$0xff]
        %s687 = scalar_lea.vmem %s1, 16
        %v688 = vld [vmem:[%s687] sm:$0xff]
        %v690 = vsel %vm236, %v655, 0
        %v693 = vsel %vm236, %v656, 0
        %v696 = vsel %vm236, %v657, 0
        %v699 = vsel %vm236, %v658, 0
        %v702 = vsel %vm236, %v659, 0
        %v705 = vsel %vm236, %v660, 0
        %v708 = vsel %vm236, %v661, 0
        %v711 = vsel %vm236, %v662, 0
        %v714 = vsel %vm236, %v663, 0
        %v717 = vsel %vm236, %v664, 0
        %v720 = vsel %vm236, %v665, 0
        %v723 = vsel %vm236, %v666, 0
        %v726 = vsel %vm236, %v667, 0
        %v729 = vsel %vm236, %v668, 0
        %v732 = vsel %vm236, %v669, 0
        %v735 = vsel %vm236, %v670, 0
        %v738 = vsel %vm236, %v671, 0
        %v741 = vsel %vm236, %v672, 0
        %v744 = vsel %vm236, %v673, 0
        %v747 = vsel %vm236, %v674, 0
        %v750 = vsel %vm236, %v675, 0
        %v753 = vsel %vm236, %v676, 0
        %v756 = vsel %vm236, %v677, 0
        %v759 = vsel %vm236, %v678, 0
        %v762 = vsel %vm236, %v679, 0
        %v765 = vsel %vm236, %v680, 0
        %v768 = vsel %vm236, %v681, 0
        %v771 = vsel %vm236, %v682, 0
        %v774 = vsel %vm236, %v683, 0
        %v777 = vsel %vm236, %v684, 0
        %v780 = vsel %vm236, %v685, 0
        %v783 = vsel %vm236, %v686, 0
        %785 = vmatpush.msra.mxu0 0.0
        %786 = vmatpush.msra.mxu0 0.0
        %787 = vmatpush.msra.mxu0 0.0
        %788 = vmatpush.msra.mxu0 0.0
        %789 = vmatpush.msra.mxu0 0.0
        %790 = vmatpush.msra.mxu0 0.0
        %791 = vmatpush.msra.mxu0 0.0
        %792 = vmatpush.msra.mxu0 0.0
        %793 = vmatpush.msra.mxu0 0.0
        %794 = vmatpush.msra.mxu0 0.0
        %795 = vmatpush.msra.mxu0 0.0
        %796 = vmatpush.msra.mxu0 0.0
        %797 = vmatpush.msra.mxu0 0.0
        %798 = vmatpush.msra.mxu0 0.0
        %799 = vmatpush.msra.mxu0 0.0
        %800 = vmatpush.msra.mxu0 %v688
        %801 = vmatmul.f32.gmra.mxu0 %v690
        %v802 = vpop.f32.mrf.mxu0
        %v803 = vadd.f32 0.0, %v802
        %804 = vmatmul.f32.gmra.mxu0 %v693
        %v805 = vpop.f32.mrf.mxu0
        %v806 = vadd.f32 0.0, %v805
        %807 = vmatmul.f32.gmra.mxu0 %v696
        %v808 = vpop.f32.mrf.mxu0
        %v809 = vadd.f32 0.0, %v808
        %810 = vmatmul.f32.gmra.mxu0 %v699
        %v811 = vpop.f32.mrf.mxu0
        %v812 = vadd.f32 0.0, %v811
        %813 = vmatmul.f32.gmra.mxu0 %v702
        %v814 = vpop.f32.mrf.mxu0
        %v815 = vadd.f32 0.0, %v814
        %816 = vmatmul.f32.gmra.mxu0 %v705
        %v817 = vpop.f32.mrf.mxu0
        %v818 = vadd.f32 0.0, %v817
        %819 = vmatmul.f32.gmra.mxu0 %v708
        %v820 = vpop.f32.mrf.mxu0
        %v821 = vadd.f32 0.0, %v820
        %822 = vmatmul.f32.gmra.mxu0 %v711
        %v823 = vpop.f32.mrf.mxu0
        %v824 = vadd.f32 0.0, %v823
        %825 = vmatmul.f32.gmra.mxu0 %v714
        %v826 = vpop.f32.mrf.mxu0
        %v827 = vadd.f32 0.0, %v826
        %828 = vmatmul.f32.gmra.mxu0 %v717
        %v829 = vpop.f32.mrf.mxu0
        %v830 = vadd.f32 0.0, %v829
        %831 = vmatmul.f32.gmra.mxu0 %v720
        %v832 = vpop.f32.mrf.mxu0
        %v833 = vadd.f32 0.0, %v832
        %834 = vmatmul.f32.gmra.mxu0 %v723
        %v835 = vpop.f32.mrf.mxu0
        %v836 = vadd.f32 0.0, %v835
        %837 = vmatmul.f32.gmra.mxu0 %v726
        %v838 = vpop.f32.mrf.mxu0
        %v839 = vadd.f32 0.0, %v838
        %840 = vmatmul.f32.gmra.mxu0 %v729
        %v841 = vpop.f32.mrf.mxu0
        %v842 = vadd.f32 0.0, %v841
        %843 = vmatmul.f32.gmra.mxu0 %v732
        %v844 = vpop.f32.mrf.mxu0
        %v845 = vadd.f32 0.0, %v844
        %846 = vmatmul.f32.gmra.mxu0 %v735
        %v847 = vpop.f32.mrf.mxu0
        %v848 = vadd.f32 0.0, %v847
        %849 = vmatmul.f32.gmra.mxu0 %v738
        %v850 = vpop.f32.mrf.mxu0
        %v851 = vadd.f32 0.0, %v850
        %852 = vmatmul.f32.gmra.mxu0 %v741
        %v853 = vpop.f32.mrf.mxu0
        %v854 = vadd.f32 0.0, %v853
        %855 = vmatmul.f32.gmra.mxu0 %v744
        %v856 = vpop.f32.mrf.mxu0
        %v857 = vadd.f32 0.0, %v856
        %858 = vmatmul.f32.gmra.mxu0 %v747
        %v859 = vpop.f32.mrf.mxu0
        %v860 = vadd.f32 0.0, %v859
        %861 = vmatmul.f32.gmra.mxu0 %v750
        %v862 = vpop.f32.mrf.mxu0
        %v863 = vadd.f32 0.0, %v862
        %864 = vmatmul.f32.gmra.mxu0 %v753
        %v865 = vpop.f32.mrf.mxu0
        %v866 = vadd.f32 0.0, %v865
        %867 = vmatmul.f32.gmra.mxu0 %v756
        %v868 = vpop.f32.mrf.mxu0
        %v869 = vadd.f32 0.0, %v868
        %870 = vmatmul.f32.gmra.mxu0 %v759
        %v871 = vpop.f32.mrf.mxu0
        %v872 = vadd.f32 0.0, %v871
        %873 = vmatmul.f32.gmra.mxu0 %v762
        %v874 = vpop.f32.mrf.mxu0
        %v875 = vadd.f32 0.0, %v874
        %876 = vmatmul.f32.gmra.mxu0 %v765
        %v877 = vpop.f32.mrf.mxu0
        %v878 = vadd.f32 0.0, %v877
        %879 = vmatmul.f32.gmra.mxu0 %v768
        %v880 = vpop.f32.mrf.mxu0
        %v881 = vadd.f32 0.0, %v880
        %882 = vmatmul.f32.gmra.mxu0 %v771
        %v883 = vpop.f32.mrf.mxu0
        %v884 = vadd.f32 0.0, %v883
        %885 = vmatmul.f32.gmra.mxu0 %v774
        %v886 = vpop.f32.mrf.mxu0
        %v887 = vadd.f32 0.0, %v886
        %888 = vmatmul.f32.gmra.mxu0 %v777
        %v889 = vpop.f32.mrf.mxu0
        %v890 = vadd.f32 0.0, %v889
        %891 = vmatmul.f32.gmra.mxu0 %v780
        %v892 = vpop.f32.mrf.mxu0
        %v893 = vadd.f32 0.0, %v892
        %894 = vmatmul.f32.gmra.mxu0 %v783
        %v895 = vpop.f32.mrf.mxu0
        %v896 = vadd.f32 0.0, %v895
        %897 = vdwg.mxu0
        %v898 = vadd.f32 %v560, %v803
        %v899 = vadd.f32 %v563, %v806
        %v900 = vadd.f32 %v566, %v809
        %v901 = vadd.f32 %v569, %v812
        %v902 = vadd.f32 %v572, %v815
        %v903 = vadd.f32 %v575, %v818
        %v904 = vadd.f32 %v578, %v821
        %v905 = vadd.f32 %v581, %v824
        %v906 = vadd.f32 %v584, %v827
        %v907 = vadd.f32 %v587, %v830
        %v908 = vadd.f32 %v590, %v833
        %v909 = vadd.f32 %v593, %v836
        %v910 = vadd.f32 %v596, %v839
        %v911 = vadd.f32 %v599, %v842
        %v912 = vadd.f32 %v602, %v845
        %v913 = vadd.f32 %v605, %v848
        %v914 = vadd.f32 %v608, %v851
        %v915 = vadd.f32 %v611, %v854
        %v916 = vadd.f32 %v614, %v857
        %v917 = vadd.f32 %v617, %v860
        %v918 = vadd.f32 %v620, %v863
        %v919 = vadd.f32 %v623, %v866
        %v920 = vadd.f32 %v626, %v869
        %v921 = vadd.f32 %v629, %v872
        %v922 = vadd.f32 %v632, %v875
        %v923 = vadd.f32 %v635, %v878
        %v924 = vadd.f32 %v638, %v881
        %v925 = vadd.f32 %v641, %v884
        %v926 = vadd.f32 %v644, %v887
        %v927 = vadd.f32 %v647, %v890
        %v928 = vadd.f32 %v650, %v893
        %v929 = vadd.f32 %v653, %v896
        %s930 = scalar_lea.vmem %s168, 24
        %v931 = vld [vmem:[%s930] sm:$0xff]
        %v932 = vld [vmem:[%s930 + $0x8] sm:$0xff]
        %v933 = vld [vmem:[%s930 + $0x18] sm:$0xff]
        %v934 = vld [vmem:[%s930 + $0x20] sm:$0xff]
        %v935 = vld [vmem:[%s930 + $0x30] sm:$0xff]
        %v936 = vld [vmem:[%s930 + $0x38] sm:$0xff]
        %v937 = vld [vmem:[%s930 + $0x48] sm:$0xff]
        %v938 = vld [vmem:[%s930 + $0x50] sm:$0xff]
        %v939 = vld [vmem:[%s930 + $0x60] sm:$0xff]
        %v940 = vld [vmem:[%s930 + $0x68] sm:$0xff]
        %v941 = vld [vmem:[%s930 + $0x78] sm:$0xff]
        %v942 = vld [vmem:[%s930 + $0x80] sm:$0xff]
        %v943 = vld [vmem:[%s930 + $0x90] sm:$0xff]
        %v944 = vld [vmem:[%s930 + $0x98] sm:$0xff]
        %v945 = vld [vmem:[%s930 + $0xa8] sm:$0xff]
        %v946 = vld [vmem:[%s930 + $0xb0] sm:$0xff]
        %v947 = vld [vmem:[%s930 + $0xc0] sm:$0xff]
        %v948 = vld [vmem:[%s930 + $0xc8] sm:$0xff]
        %v949 = vld [vmem:[%s930 + $0xd8] sm:$0xff]
        %v950 = vld [vmem:[%s930 + $0xe0] sm:$0xff]
        %v951 = vld [vmem:[%s930 + $0xf0] sm:$0xff]
        %v952 = vld [vmem:[%s930 + $0xf8] sm:$0xff]
        %v953 = vld [vmem:[%s930 + $0x108] sm:$0xff]
        %v954 = vld [vmem:[%s930 + $0x110] sm:$0xff]
        %v955 = vld [vmem:[%s930 + $0x120] sm:$0xff]
        %v956 = vld [vmem:[%s930 + $0x128] sm:$0xff]
        %v957 = vld [vmem:[%s930 + $0x138] sm:$0xff]
        %v958 = vld [vmem:[%s930 + $0x140] sm:$0xff]
        %v959 = vld [vmem:[%s930 + $0x150] sm:$0xff]
        %v960 = vld [vmem:[%s930 + $0x158] sm:$0xff]
        %v961 = vld [vmem:[%s930 + $0x168] sm:$0xff]
        %v962 = vld [vmem:[%s930 + $0x170] sm:$0xff]
        %s963 = scalar_lea.vmem %s1, 24
        %v964 = vld [vmem:[%s963] sm:$0xff]
        %v966 = vsel %vm236, %v931, 0
        %v969 = vsel %vm236, %v932, 0
        %v972 = vsel %vm236, %v933, 0
        %v975 = vsel %vm236, %v934, 0
        %v978 = vsel %vm236, %v935, 0
        %v981 = vsel %vm236, %v936, 0
        %v984 = vsel %vm236, %v937, 0
        %v987 = vsel %vm236, %v938, 0
        %v990 = vsel %vm236, %v939, 0
        %v993 = vsel %vm236, %v940, 0
        %v996 = vsel %vm236, %v941, 0
        %v999 = vsel %vm236, %v942, 0
        %v1002 = vsel %vm236, %v943, 0
        %v1005 = vsel %vm236, %v944, 0
        %v1008 = vsel %vm236, %v945, 0
        %v1011 = vsel %vm236, %v946, 0
        %v1014 = vsel %vm236, %v947, 0
        %v1017 = vsel %vm236, %v948, 0
        %v1020 = vsel %vm236, %v949, 0
        %v1023 = vsel %vm236, %v950, 0
        %v1026 = vsel %vm236, %v951, 0
        %v1029 = vsel %vm236, %v952, 0
        %v1032 = vsel %vm236, %v953, 0
        %v1035 = vsel %vm236, %v954, 0
        %v1038 = vsel %vm236, %v955, 0
        %v1041 = vsel %vm236, %v956, 0
        %v1044 = vsel %vm236, %v957, 0
        %v1047 = vsel %vm236, %v958, 0
        %v1050 = vsel %vm236, %v959, 0
        %v1053 = vsel %vm236, %v960, 0
        %v1056 = vsel %vm236, %v961, 0
        %v1059 = vsel %vm236, %v962, 0
        %1061 = vmatpush.msra.mxu0 0.0
        %1062 = vmatpush.msra.mxu0 0.0
        %1063 = vmatpush.msra.mxu0 0.0
        %1064 = vmatpush.msra.mxu0 0.0
        %1065 = vmatpush.msra.mxu0 0.0
        %1066 = vmatpush.msra.mxu0 0.0
        %1067 = vmatpush.msra.mxu0 0.0
        %1068 = vmatpush.msra.mxu0 0.0
        %1069 = vmatpush.msra.mxu0 0.0
        %1070 = vmatpush.msra.mxu0 0.0
        %1071 = vmatpush.msra.mxu0 0.0
        %1072 = vmatpush.msra.mxu0 0.0
        %1073 = vmatpush.msra.mxu0 0.0
        %1074 = vmatpush.msra.mxu0 0.0
        %1075 = vmatpush.msra.mxu0 0.0
        %1076 = vmatpush.msra.mxu0 %v964
        %1077 = vmatmul.f32.gmra.mxu0 %v966
        %v1078 = vpop.f32.mrf.mxu0
        %v1079 = vadd.f32 0.0, %v1078
        %1080 = vmatmul.f32.gmra.mxu0 %v969
        %v1081 = vpop.f32.mrf.mxu0
        %v1082 = vadd.f32 0.0, %v1081
        %1083 = vmatmul.f32.gmra.mxu0 %v972
        %v1084 = vpop.f32.mrf.mxu0
        %v1085 = vadd.f32 0.0, %v1084
        %1086 = vmatmul.f32.gmra.mxu0 %v975
        %v1087 = vpop.f32.mrf.mxu0
        %v1088 = vadd.f32 0.0, %v1087
        %1089 = vmatmul.f32.gmra.mxu0 %v978
        %v1090 = vpop.f32.mrf.mxu0
        %v1091 = vadd.f32 0.0, %v1090
        %1092 = vmatmul.f32.gmra.mxu0 %v981
        %v1093 = vpop.f32.mrf.mxu0
        %v1094 = vadd.f32 0.0, %v1093
        %1095 = vmatmul.f32.gmra.mxu0 %v984
        %v1096 = vpop.f32.mrf.mxu0
        %v1097 = vadd.f32 0.0, %v1096
        %1098 = vmatmul.f32.gmra.mxu0 %v987
        %v1099 = vpop.f32.mrf.mxu0
        %v1100 = vadd.f32 0.0, %v1099
        %1101 = vmatmul.f32.gmra.mxu0 %v990
        %v1102 = vpop.f32.mrf.mxu0
        %v1103 = vadd.f32 0.0, %v1102
        %1104 = vmatmul.f32.gmra.mxu0 %v993
        %v1105 = vpop.f32.mrf.mxu0
        %v1106 = vadd.f32 0.0, %v1105
        %1107 = vmatmul.f32.gmra.mxu0 %v996
        %v1108 = vpop.f32.mrf.mxu0
        %v1109 = vadd.f32 0.0, %v1108
        %1110 = vmatmul.f32.gmra.mxu0 %v999
        %v1111 = vpop.f32.mrf.mxu0
        %v1112 = vadd.f32 0.0, %v1111
        %1113 = vmatmul.f32.gmra.mxu0 %v1002
        %v1114 = vpop.f32.mrf.mxu0
        %v1115 = vadd.f32 0.0, %v1114
        %1116 = vmatmul.f32.gmra.mxu0 %v1005
        %v1117 = vpop.f32.mrf.mxu0
        %v1118 = vadd.f32 0.0, %v1117
        %1119 = vmatmul.f32.gmra.mxu0 %v1008
        %v1120 = vpop.f32.mrf.mxu0
        %v1121 = vadd.f32 0.0, %v1120
        %1122 = vmatmul.f32.gmra.mxu0 %v1011
        %v1123 = vpop.f32.mrf.mxu0
        %v1124 = vadd.f32 0.0, %v1123
        %1125 = vmatmul.f32.gmra.mxu0 %v1014
        %v1126 = vpop.f32.mrf.mxu0
        %v1127 = vadd.f32 0.0, %v1126
        %1128 = vmatmul.f32.gmra.mxu0 %v1017
        %v1129 = vpop.f32.mrf.mxu0
        %v1130 = vadd.f32 0.0, %v1129
        %1131 = vmatmul.f32.gmra.mxu0 %v1020
        %v1132 = vpop.f32.mrf.mxu0
        %v1133 = vadd.f32 0.0, %v1132
        %1134 = vmatmul.f32.gmra.mxu0 %v1023
        %v1135 = vpop.f32.mrf.mxu0
        %v1136 = vadd.f32 0.0, %v1135
        %1137 = vmatmul.f32.gmra.mxu0 %v1026
        %v1138 = vpop.f32.mrf.mxu0
        %v1139 = vadd.f32 0.0, %v1138
        %1140 = vmatmul.f32.gmra.mxu0 %v1029
        %v1141 = vpop.f32.mrf.mxu0
        %v1142 = vadd.f32 0.0, %v1141
        %1143 = vmatmul.f32.gmra.mxu0 %v1032
        %v1144 = vpop.f32.mrf.mxu0
        %v1145 = vadd.f32 0.0, %v1144
        %1146 = vmatmul.f32.gmra.mxu0 %v1035
        %v1147 = vpop.f32.mrf.mxu0
        %v1148 = vadd.f32 0.0, %v1147
        %1149 = vmatmul.f32.gmra.mxu0 %v1038
        %v1150 = vpop.f32.mrf.mxu0
        %v1151 = vadd.f32 0.0, %v1150
        %1152 = vmatmul.f32.gmra.mxu0 %v1041
        %v1153 = vpop.f32.mrf.mxu0
        %v1154 = vadd.f32 0.0, %v1153
        %1155 = vmatmul.f32.gmra.mxu0 %v1044
        %v1156 = vpop.f32.mrf.mxu0
        %v1157 = vadd.f32 0.0, %v1156
        %1158 = vmatmul.f32.gmra.mxu0 %v1047
        %v1159 = vpop.f32.mrf.mxu0
        %v1160 = vadd.f32 0.0, %v1159
        %1161 = vmatmul.f32.gmra.mxu0 %v1050
        %v1162 = vpop.f32.mrf.mxu0
        %v1163 = vadd.f32 0.0, %v1162
        %1164 = vmatmul.f32.gmra.mxu0 %v1053
        %v1165 = vpop.f32.mrf.mxu0
        %v1166 = vadd.f32 0.0, %v1165
        %1167 = vmatmul.f32.gmra.mxu0 %v1056
        %v1168 = vpop.f32.mrf.mxu0
        %v1169 = vadd.f32 0.0, %v1168
        %1170 = vmatmul.f32.gmra.mxu0 %v1059
        %v1171 = vpop.f32.mrf.mxu0
        %v1172 = vadd.f32 0.0, %v1171
        %1173 = vdwg.mxu0
        %v1174 = vadd.f32 %v898, %v1079
        %v1175 = vadd.f32 %v899, %v1082
        %v1176 = vadd.f32 %v900, %v1085
        %v1177 = vadd.f32 %v901, %v1088
        %v1178 = vadd.f32 %v902, %v1091
        %v1179 = vadd.f32 %v903, %v1094
        %v1180 = vadd.f32 %v904, %v1097
        %v1181 = vadd.f32 %v905, %v1100
        %v1182 = vadd.f32 %v906, %v1103
        %v1183 = vadd.f32 %v907, %v1106
        %v1184 = vadd.f32 %v908, %v1109
        %v1185 = vadd.f32 %v909, %v1112
        %v1186 = vadd.f32 %v910, %v1115
        %v1187 = vadd.f32 %v911, %v1118
        %v1188 = vadd.f32 %v912, %v1121
        %v1189 = vadd.f32 %v913, %v1124
        %v1190 = vadd.f32 %v914, %v1127
        %v1191 = vadd.f32 %v915, %v1130
        %v1192 = vadd.f32 %v916, %v1133
        %v1193 = vadd.f32 %v917, %v1136
        %v1194 = vadd.f32 %v918, %v1139
        %v1195 = vadd.f32 %v919, %v1142
        %v1196 = vadd.f32 %v920, %v1145
        %v1197 = vadd.f32 %v921, %v1148
        %v1198 = vadd.f32 %v922, %v1151
        %v1199 = vadd.f32 %v923, %v1154
        %v1200 = vadd.f32 %v924, %v1157
        %v1201 = vadd.f32 %v925, %v1160
        %v1202 = vadd.f32 %v926, %v1163
        %v1203 = vadd.f32 %v927, %v1166
        %v1204 = vadd.f32 %v928, %v1169
        %v1205 = vadd.f32 %v929, %v1172
        %v1206 = vld [vmem:[%s930 + $0x1] sm:$0xff]
        %v1207 = vld [vmem:[%s930 + $0x9] sm:$0xff]
        %v1208 = vld [vmem:[%s930 + $0x19] sm:$0xff]
        %v1209 = vld [vmem:[%s930 + $0x21] sm:$0xff]
        %v1210 = vld [vmem:[%s930 + $0x31] sm:$0xff]
        %v1211 = vld [vmem:[%s930 + $0x39] sm:$0xff]
        %v1212 = vld [vmem:[%s930 + $0x49] sm:$0xff]
        %v1213 = vld [vmem:[%s930 + $0x51] sm:$0xff]
        %v1214 = vld [vmem:[%s930 + $0x61] sm:$0xff]
        %v1215 = vld [vmem:[%s930 + $0x69] sm:$0xff]
        %v1216 = vld [vmem:[%s930 + $0x79] sm:$0xff]
        %v1217 = vld [vmem:[%s930 + $0x81] sm:$0xff]
        %v1218 = vld [vmem:[%s930 + $0x91] sm:$0xff]
        %v1219 = vld [vmem:[%s930 + $0x99] sm:$0xff]
        %v1220 = vld [vmem:[%s930 + $0xa9] sm:$0xff]
        %v1221 = vld [vmem:[%s930 + $0xb1] sm:$0xff]
        %v1222 = vld [vmem:[%s930 + $0xc1] sm:$0xff]
        %v1223 = vld [vmem:[%s930 + $0xc9] sm:$0xff]
        %v1224 = vld [vmem:[%s930 + $0xd9] sm:$0xff]
        %v1225 = vld [vmem:[%s930 + $0xe1] sm:$0xff]
        %v1226 = vld [vmem:[%s930 + $0xf1] sm:$0xff]
        %v1227 = vld [vmem:[%s930 + $0xf9] sm:$0xff]
        %v1228 = vld [vmem:[%s930 + $0x109] sm:$0xff]
        %v1229 = vld [vmem:[%s930 + $0x111] sm:$0xff]
        %v1230 = vld [vmem:[%s930 + $0x121] sm:$0xff]
        %v1231 = vld [vmem:[%s930 + $0x129] sm:$0xff]
        %v1232 = vld [vmem:[%s930 + $0x139] sm:$0xff]
        %v1233 = vld [vmem:[%s930 + $0x141] sm:$0xff]
        %v1234 = vld [vmem:[%s930 + $0x151] sm:$0xff]
        %v1235 = vld [vmem:[%s930 + $0x159] sm:$0xff]
        %v1236 = vld [vmem:[%s930 + $0x169] sm:$0xff]
        %v1237 = vld [vmem:[%s930 + $0x171] sm:$0xff]
        %s1238 = scalar_lea.vmem %s1, 32
        %v1239 = vld [vmem:[%s1238] sm:$0xff]
        %v1241 = vsel %vm236, %v1206, 0
        %v1244 = vsel %vm236, %v1207, 0
        %v1247 = vsel %vm236, %v1208, 0
        %v1250 = vsel %vm236, %v1209, 0
        %v1253 = vsel %vm236, %v1210, 0
        %v1256 = vsel %vm236, %v1211, 0
        %v1259 = vsel %vm236, %v1212, 0
        %v1262 = vsel %vm236, %v1213, 0
        %v1265 = vsel %vm236, %v1214, 0
        %v1268 = vsel %vm236, %v1215, 0
        %v1271 = vsel %vm236, %v1216, 0
        %v1274 = vsel %vm236, %v1217, 0
        %v1277 = vsel %vm236, %v1218, 0
        %v1280 = vsel %vm236, %v1219, 0
        %v1283 = vsel %vm236, %v1220, 0
        %v1286 = vsel %vm236, %v1221, 0
        %v1289 = vsel %vm236, %v1222, 0
        %v1292 = vsel %vm236, %v1223, 0
        %v1295 = vsel %vm236, %v1224, 0
        %v1298 = vsel %vm236, %v1225, 0
        %v1301 = vsel %vm236, %v1226, 0
        %v1304 = vsel %vm236, %v1227, 0
        %v1307 = vsel %vm236, %v1228, 0
        %v1310 = vsel %vm236, %v1229, 0
        %v1313 = vsel %vm236, %v1230, 0
        %v1316 = vsel %vm236, %v1231, 0
        %v1319 = vsel %vm236, %v1232, 0
        %v1322 = vsel %vm236, %v1233, 0
        %v1325 = vsel %vm236, %v1234, 0
        %v1328 = vsel %vm236, %v1235, 0
        %v1331 = vsel %vm236, %v1236, 0
        %v1334 = vsel %vm236, %v1237, 0
        %1336 = vmatpush.msra.mxu0 0.0
        %1337 = vmatpush.msra.mxu0 0.0
        %1338 = vmatpush.msra.mxu0 0.0
        %1339 = vmatpush.msra.mxu0 0.0
        %1340 = vmatpush.msra.mxu0 0.0
        %1341 = vmatpush.msra.mxu0 0.0
        %1342 = vmatpush.msra.mxu0 0.0
        %1343 = vmatpush.msra.mxu0 0.0
        %1344 = vmatpush.msra.mxu0 0.0
        %1345 = vmatpush.msra.mxu0 0.0
        %1346 = vmatpush.msra.mxu0 0.0
        %1347 = vmatpush.msra.mxu0 0.0
        %1348 = vmatpush.msra.mxu0 0.0
        %1349 = vmatpush.msra.mxu0 0.0
        %1350 = vmatpush.msra.mxu0 0.0
        %1351 = vmatpush.msra.mxu0 %v1239
        %1352 = vmatmul.f32.gmra.mxu0 %v1241
        %v1353 = vpop.f32.mrf.mxu0
        %v1354 = vadd.f32 0.0, %v1353
        %1355 = vmatmul.f32.gmra.mxu0 %v1244
        %v1356 = vpop.f32.mrf.mxu0
        %v1357 = vadd.f32 0.0, %v1356
        %1358 = vmatmul.f32.gmra.mxu0 %v1247
        %v1359 = vpop.f32.mrf.mxu0
        %v1360 = vadd.f32 0.0, %v1359
        %1361 = vmatmul.f32.gmra.mxu0 %v1250
        %v1362 = vpop.f32.mrf.mxu0
        %v1363 = vadd.f32 0.0, %v1362
        %1364 = vmatmul.f32.gmra.mxu0 %v1253
        %v1365 = vpop.f32.mrf.mxu0
        %v1366 = vadd.f32 0.0, %v1365
        %1367 = vmatmul.f32.gmra.mxu0 %v1256
        %v1368 = vpop.f32.mrf.mxu0
        %v1369 = vadd.f32 0.0, %v1368
        %1370 = vmatmul.f32.gmra.mxu0 %v1259
        %v1371 = vpop.f32.mrf.mxu0
        %v1372 = vadd.f32 0.0, %v1371
        %1373 = vmatmul.f32.gmra.mxu0 %v1262
        %v1374 = vpop.f32.mrf.mxu0
        %v1375 = vadd.f32 0.0, %v1374
        %1376 = vmatmul.f32.gmra.mxu0 %v1265
        %v1377 = vpop.f32.mrf.mxu0
        %v1378 = vadd.f32 0.0, %v1377
        %1379 = vmatmul.f32.gmra.mxu0 %v1268
        %v1380 = vpop.f32.mrf.mxu0
        %v1381 = vadd.f32 0.0, %v1380
        %1382 = vmatmul.f32.gmra.mxu0 %v1271
        %v1383 = vpop.f32.mrf.mxu0
        %v1384 = vadd.f32 0.0, %v1383
        %1385 = vmatmul.f32.gmra.mxu0 %v1274
        %v1386 = vpop.f32.mrf.mxu0
        %v1387 = vadd.f32 0.0, %v1386
        %1388 = vmatmul.f32.gmra.mxu0 %v1277
        %v1389 = vpop.f32.mrf.mxu0
        %v1390 = vadd.f32 0.0, %v1389
        %1391 = vmatmul.f32.gmra.mxu0 %v1280
        %v1392 = vpop.f32.mrf.mxu0
        %v1393 = vadd.f32 0.0, %v1392
        %1394 = vmatmul.f32.gmra.mxu0 %v1283
        %v1395 = vpop.f32.mrf.mxu0
        %v1396 = vadd.f32 0.0, %v1395
        %1397 = vmatmul.f32.gmra.mxu0 %v1286
        %v1398 = vpop.f32.mrf.mxu0
        %v1399 = vadd.f32 0.0, %v1398
        %1400 = vmatmul.f32.gmra.mxu0 %v1289
        %v1401 = vpop.f32.mrf.mxu0
        %v1402 = vadd.f32 0.0, %v1401
        %1403 = vmatmul.f32.gmra.mxu0 %v1292
        %v1404 = vpop.f32.mrf.mxu0
        %v1405 = vadd.f32 0.0, %v1404
        %1406 = vmatmul.f32.gmra.mxu0 %v1295
        %v1407 = vpop.f32.mrf.mxu0
        %v1408 = vadd.f32 0.0, %v1407
        %1409 = vmatmul.f32.gmra.mxu0 %v1298
        %v1410 = vpop.f32.mrf.mxu0
        %v1411 = vadd.f32 0.0, %v1410
        %1412 = vmatmul.f32.gmra.mxu0 %v1301
        %v1413 = vpop.f32.mrf.mxu0
        %v1414 = vadd.f32 0.0, %v1413
        %1415 = vmatmul.f32.gmra.mxu0 %v1304
        %v1416 = vpop.f32.mrf.mxu0
        %v1417 = vadd.f32 0.0, %v1416
        %1418 = vmatmul.f32.gmra.mxu0 %v1307
        %v1419 = vpop.f32.mrf.mxu0
        %v1420 = vadd.f32 0.0, %v1419
        %1421 = vmatmul.f32.gmra.mxu0 %v1310
        %v1422 = vpop.f32.mrf.mxu0
        %v1423 = vadd.f32 0.0, %v1422
        %1424 = vmatmul.f32.gmra.mxu0 %v1313
        %v1425 = vpop.f32.mrf.mxu0
        %v1426 = vadd.f32 0.0, %v1425
        %1427 = vmatmul.f32.gmra.mxu0 %v1316
        %v1428 = vpop.f32.mrf.mxu0
        %v1429 = vadd.f32 0.0, %v1428
        %1430 = vmatmul.f32.gmra.mxu0 %v1319
        %v1431 = vpop.f32.mrf.mxu0
        %v1432 = vadd.f32 0.0, %v1431
        %1433 = vmatmul.f32.gmra.mxu0 %v1322
        %v1434 = vpop.f32.mrf.mxu0
        %v1435 = vadd.f32 0.0, %v1434
        %1436 = vmatmul.f32.gmra.mxu0 %v1325
        %v1437 = vpop.f32.mrf.mxu0
        %v1438 = vadd.f32 0.0, %v1437
        %1439 = vmatmul.f32.gmra.mxu0 %v1328
        %v1440 = vpop.f32.mrf.mxu0
        %v1441 = vadd.f32 0.0, %v1440
        %1442 = vmatmul.f32.gmra.mxu0 %v1331
        %v1443 = vpop.f32.mrf.mxu0
        %v1444 = vadd.f32 0.0, %v1443
        %1445 = vmatmul.f32.gmra.mxu0 %v1334
        %v1446 = vpop.f32.mrf.mxu0
        %v1447 = vadd.f32 0.0, %v1446
        %1448 = vdwg.mxu0
        %v1449 = vadd.f32 %v1174, %v1354
        %v1450 = vadd.f32 %v1175, %v1357
        %v1451 = vadd.f32 %v1176, %v1360
        %v1452 = vadd.f32 %v1177, %v1363
        %v1453 = vadd.f32 %v1178, %v1366
        %v1454 = vadd.f32 %v1179, %v1369
        %v1455 = vadd.f32 %v1180, %v1372
        %v1456 = vadd.f32 %v1181, %v1375
        %v1457 = vadd.f32 %v1182, %v1378
        %v1458 = vadd.f32 %v1183, %v1381
        %v1459 = vadd.f32 %v1184, %v1384
        %v1460 = vadd.f32 %v1185, %v1387
        %v1461 = vadd.f32 %v1186, %v1390
        %v1462 = vadd.f32 %v1187, %v1393
        %v1463 = vadd.f32 %v1188, %v1396
        %v1464 = vadd.f32 %v1189, %v1399
        %v1465 = vadd.f32 %v1190, %v1402
        %v1466 = vadd.f32 %v1191, %v1405
        %v1467 = vadd.f32 %v1192, %v1408
        %v1468 = vadd.f32 %v1193, %v1411
        %v1469 = vadd.f32 %v1194, %v1414
        %v1470 = vadd.f32 %v1195, %v1417
        %v1471 = vadd.f32 %v1196, %v1420
        %v1472 = vadd.f32 %v1197, %v1423
        %v1473 = vadd.f32 %v1198, %v1426
        %v1474 = vadd.f32 %v1199, %v1429
        %v1475 = vadd.f32 %v1200, %v1432
        %v1476 = vadd.f32 %v1201, %v1435
        %v1477 = vadd.f32 %v1202, %v1438
        %v1478 = vadd.f32 %v1203, %v1441
        %v1479 = vadd.f32 %v1204, %v1444
        %v1480 = vadd.f32 %v1205, %v1447
        %v1481 = vld [vmem:[%s930 + $0x2] sm:$0xff]
        %v1482 = vld [vmem:[%s930 + $0xa] sm:$0xff]
        %v1483 = vld [vmem:[%s930 + $0x1a] sm:$0xff]
        %v1484 = vld [vmem:[%s930 + $0x22] sm:$0xff]
        %v1485 = vld [vmem:[%s930 + $0x32] sm:$0xff]
        %v1486 = vld [vmem:[%s930 + $0x3a] sm:$0xff]
        %v1487 = vld [vmem:[%s930 + $0x4a] sm:$0xff]
        %v1488 = vld [vmem:[%s930 + $0x52] sm:$0xff]
        %v1489 = vld [vmem:[%s930 + $0x62] sm:$0xff]
        %v1490 = vld [vmem:[%s930 + $0x6a] sm:$0xff]
        %v1491 = vld [vmem:[%s930 + $0x7a] sm:$0xff]
        %v1492 = vld [vmem:[%s930 + $0x82] sm:$0xff]
        %v1493 = vld [vmem:[%s930 + $0x92] sm:$0xff]
        %v1494 = vld [vmem:[%s930 + $0x9a] sm:$0xff]
        %v1495 = vld [vmem:[%s930 + $0xaa] sm:$0xff]
        %v1496 = vld [vmem:[%s930 + $0xb2] sm:$0xff]
        %v1497 = vld [vmem:[%s930 + $0xc2] sm:$0xff]
        %v1498 = vld [vmem:[%s930 + $0xca] sm:$0xff]
        %v1499 = vld [vmem:[%s930 + $0xda] sm:$0xff]
        %v1500 = vld [vmem:[%s930 + $0xe2] sm:$0xff]
        %v1501 = vld [vmem:[%s930 + $0xf2] sm:$0xff]
        %v1502 = vld [vmem:[%s930 + $0xfa] sm:$0xff]
        %v1503 = vld [vmem:[%s930 + $0x10a] sm:$0xff]
        %v1504 = vld [vmem:[%s930 + $0x112] sm:$0xff]
        %v1505 = vld [vmem:[%s930 + $0x122] sm:$0xff]
        %v1506 = vld [vmem:[%s930 + $0x12a] sm:$0xff]
        %v1507 = vld [vmem:[%s930 + $0x13a] sm:$0xff]
        %v1508 = vld [vmem:[%s930 + $0x142] sm:$0xff]
        %v1509 = vld [vmem:[%s930 + $0x152] sm:$0xff]
        %v1510 = vld [vmem:[%s930 + $0x15a] sm:$0xff]
        %v1511 = vld [vmem:[%s930 + $0x16a] sm:$0xff]
        %v1512 = vld [vmem:[%s930 + $0x172] sm:$0xff]
        %s1513 = scalar_lea.vmem %s1, 40
        %v1514 = vld [vmem:[%s1513] sm:$0xff]
        %v1516 = vsel %vm236, %v1481, 0
        %v1519 = vsel %vm236, %v1482, 0
        %v1522 = vsel %vm236, %v1483, 0
        %v1525 = vsel %vm236, %v1484, 0
        %v1528 = vsel %vm236, %v1485, 0
        %v1531 = vsel %vm236, %v1486, 0
        %v1534 = vsel %vm236, %v1487, 0
        %v1537 = vsel %vm236, %v1488, 0
        %v1540 = vsel %vm236, %v1489, 0
        %v1543 = vsel %vm236, %v1490, 0
        %v1546 = vsel %vm236, %v1491, 0
        %v1549 = vsel %vm236, %v1492, 0
        %v1552 = vsel %vm236, %v1493, 0
        %v1555 = vsel %vm236, %v1494, 0
        %v1558 = vsel %vm236, %v1495, 0
        %v1561 = vsel %vm236, %v1496, 0
        %v1564 = vsel %vm236, %v1497, 0
        %v1567 = vsel %vm236, %v1498, 0
        %v1570 = vsel %vm236, %v1499, 0
        %v1573 = vsel %vm236, %v1500, 0
        %v1576 = vsel %vm236, %v1501, 0
        %v1579 = vsel %vm236, %v1502, 0
        %v1582 = vsel %vm236, %v1503, 0
        %v1585 = vsel %vm236, %v1504, 0
        %v1588 = vsel %vm236, %v1505, 0
        %v1591 = vsel %vm236, %v1506, 0
        %v1594 = vsel %vm236, %v1507, 0
        %v1597 = vsel %vm236, %v1508, 0
        %v1600 = vsel %vm236, %v1509, 0
        %v1603 = vsel %vm236, %v1510, 0
        %v1606 = vsel %vm236, %v1511, 0
        %v1609 = vsel %vm236, %v1512, 0
        %1611 = vmatpush.msra.mxu0 0.0
        %1612 = vmatpush.msra.mxu0 0.0
        %1613 = vmatpush.msra.mxu0 0.0
        %1614 = vmatpush.msra.mxu0 0.0
        %1615 = vmatpush.msra.mxu0 0.0
        %1616 = vmatpush.msra.mxu0 0.0
        %1617 = vmatpush.msra.mxu0 0.0
        %1618 = vmatpush.msra.mxu0 0.0
        %1619 = vmatpush.msra.mxu0 0.0
        %1620 = vmatpush.msra.mxu0 0.0
        %1621 = vmatpush.msra.mxu0 0.0
        %1622 = vmatpush.msra.mxu0 0.0
        %1623 = vmatpush.msra.mxu0 0.0
        %1624 = vmatpush.msra.mxu0 0.0
        %1625 = vmatpush.msra.mxu0 0.0
        %1626 = vmatpush.msra.mxu0 %v1514
        %1627 = vmatmul.f32.gmra.mxu0 %v1516
        %v1628 = vpop.f32.mrf.mxu0
        %v1629 = vadd.f32 0.0, %v1628
        %1630 = vmatmul.f32.gmra.mxu0 %v1519
        %v1631 = vpop.f32.mrf.mxu0
        %v1632 = vadd.f32 0.0, %v1631
        %1633 = vmatmul.f32.gmra.mxu0 %v1522
        %v1634 = vpop.f32.mrf.mxu0
        %v1635 = vadd.f32 0.0, %v1634
        %1636 = vmatmul.f32.gmra.mxu0 %v1525
        %v1637 = vpop.f32.mrf.mxu0
        %v1638 = vadd.f32 0.0, %v1637
        %1639 = vmatmul.f32.gmra.mxu0 %v1528
        %v1640 = vpop.f32.mrf.mxu0
        %v1641 = vadd.f32 0.0, %v1640
        %1642 = vmatmul.f32.gmra.mxu0 %v1531
        %v1643 = vpop.f32.mrf.mxu0
        %v1644 = vadd.f32 0.0, %v1643
        %1645 = vmatmul.f32.gmra.mxu0 %v1534
        %v1646 = vpop.f32.mrf.mxu0
        %v1647 = vadd.f32 0.0, %v1646
        %1648 = vmatmul.f32.gmra.mxu0 %v1537
        %v1649 = vpop.f32.mrf.mxu0
        %v1650 = vadd.f32 0.0, %v1649
        %1651 = vmatmul.f32.gmra.mxu0 %v1540
        %v1652 = vpop.f32.mrf.mxu0
        %v1653 = vadd.f32 0.0, %v1652
        %1654 = vmatmul.f32.gmra.mxu0 %v1543
        %v1655 = vpop.f32.mrf.mxu0
        %v1656 = vadd.f32 0.0, %v1655
        %1657 = vmatmul.f32.gmra.mxu0 %v1546
        %v1658 = vpop.f32.mrf.mxu0
        %v1659 = vadd.f32 0.0, %v1658
        %1660 = vmatmul.f32.gmra.mxu0 %v1549
        %v1661 = vpop.f32.mrf.mxu0
        %v1662 = vadd.f32 0.0, %v1661
        %1663 = vmatmul.f32.gmra.mxu0 %v1552
        %v1664 = vpop.f32.mrf.mxu0
        %v1665 = vadd.f32 0.0, %v1664
        %1666 = vmatmul.f32.gmra.mxu0 %v1555
        %v1667 = vpop.f32.mrf.mxu0
        %v1668 = vadd.f32 0.0, %v1667
        %1669 = vmatmul.f32.gmra.mxu0 %v1558
        %v1670 = vpop.f32.mrf.mxu0
        %v1671 = vadd.f32 0.0, %v1670
        %1672 = vmatmul.f32.gmra.mxu0 %v1561
        %v1673 = vpop.f32.mrf.mxu0
        %v1674 = vadd.f32 0.0, %v1673
        %1675 = vmatmul.f32.gmra.mxu0 %v1564
        %v1676 = vpop.f32.mrf.mxu0
        %v1677 = vadd.f32 0.0, %v1676
        %1678 = vmatmul.f32.gmra.mxu0 %v1567
        %v1679 = vpop.f32.mrf.mxu0
        %v1680 = vadd.f32 0.0, %v1679
        %1681 = vmatmul.f32.gmra.mxu0 %v1570
        %v1682 = vpop.f32.mrf.mxu0
        %v1683 = vadd.f32 0.0, %v1682
        %1684 = vmatmul.f32.gmra.mxu0 %v1573
        %v1685 = vpop.f32.mrf.mxu0
        %v1686 = vadd.f32 0.0, %v1685
        %1687 = vmatmul.f32.gmra.mxu0 %v1576
        %v1688 = vpop.f32.mrf.mxu0
        %v1689 = vadd.f32 0.0, %v1688
        %1690 = vmatmul.f32.gmra.mxu0 %v1579
        %v1691 = vpop.f32.mrf.mxu0
        %v1692 = vadd.f32 0.0, %v1691
        %1693 = vmatmul.f32.gmra.mxu0 %v1582
        %v1694 = vpop.f32.mrf.mxu0
        %v1695 = vadd.f32 0.0, %v1694
        %1696 = vmatmul.f32.gmra.mxu0 %v1585
        %v1697 = vpop.f32.mrf.mxu0
        %v1698 = vadd.f32 0.0, %v1697
        %1699 = vmatmul.f32.gmra.mxu0 %v1588
        %v1700 = vpop.f32.mrf.mxu0
        %v1701 = vadd.f32 0.0, %v1700
        %1702 = vmatmul.f32.gmra.mxu0 %v1591
        %v1703 = vpop.f32.mrf.mxu0
        %v1704 = vadd.f32 0.0, %v1703
        %1705 = vmatmul.f32.gmra.mxu0 %v1594
        %v1706 = vpop.f32.mrf.mxu0
        %v1707 = vadd.f32 0.0, %v1706
        %1708 = vmatmul.f32.gmra.mxu0 %v1597
        %v1709 = vpop.f32.mrf.mxu0
        %v1710 = vadd.f32 0.0, %v1709
        %1711 = vmatmul.f32.gmra.mxu0 %v1600
        %v1712 = vpop.f32.mrf.mxu0
        %v1713 = vadd.f32 0.0, %v1712
        %1714 = vmatmul.f32.gmra.mxu0 %v1603
        %v1715 = vpop.f32.mrf.mxu0
        %v1716 = vadd.f32 0.0, %v1715
        %1717 = vmatmul.f32.gmra.mxu0 %v1606
        %v1718 = vpop.f32.mrf.mxu0
        %v1719 = vadd.f32 0.0, %v1718
        %1720 = vmatmul.f32.gmra.mxu0 %v1609
        %v1721 = vpop.f32.mrf.mxu0
        %v1722 = vadd.f32 0.0, %v1721
        %1723 = vdwg.mxu0
        %v1724 = vadd.f32 %v1449, %v1629
        %v1725 = vadd.f32 %v1450, %v1632
        %v1726 = vadd.f32 %v1451, %v1635
        %v1727 = vadd.f32 %v1452, %v1638
        %v1728 = vadd.f32 %v1453, %v1641
        %v1729 = vadd.f32 %v1454, %v1644
        %v1730 = vadd.f32 %v1455, %v1647
        %v1731 = vadd.f32 %v1456, %v1650
        %v1732 = vadd.f32 %v1457, %v1653
        %v1733 = vadd.f32 %v1458, %v1656
        %v1734 = vadd.f32 %v1459, %v1659
        %v1735 = vadd.f32 %v1460, %v1662
        %v1736 = vadd.f32 %v1461, %v1665
        %v1737 = vadd.f32 %v1462, %v1668
        %v1738 = vadd.f32 %v1463, %v1671
        %v1739 = vadd.f32 %v1464, %v1674
        %v1740 = vadd.f32 %v1465, %v1677
        %v1741 = vadd.f32 %v1466, %v1680
        %v1742 = vadd.f32 %v1467, %v1683
        %v1743 = vadd.f32 %v1468, %v1686
        %v1744 = vadd.f32 %v1469, %v1689
        %v1745 = vadd.f32 %v1470, %v1692
        %v1746 = vadd.f32 %v1471, %v1695
        %v1747 = vadd.f32 %v1472, %v1698
        %v1748 = vadd.f32 %v1473, %v1701
        %v1749 = vadd.f32 %v1474, %v1704
        %v1750 = vadd.f32 %v1475, %v1707
        %v1751 = vadd.f32 %v1476, %v1710
        %v1752 = vadd.f32 %v1477, %v1713
        %v1753 = vadd.f32 %v1478, %v1716
        %v1754 = vadd.f32 %v1479, %v1719
        %v1755 = vadd.f32 %v1480, %v1722
        %s1756 = scalar_lea.vmem %s168, 48
        %v1757 = vld [vmem:[%s1756] sm:$0xff]
        %v1758 = vld [vmem:[%s1756 + $0x8] sm:$0xff]
        %v1759 = vld [vmem:[%s1756 + $0x18] sm:$0xff]
        %v1760 = vld [vmem:[%s1756 + $0x20] sm:$0xff]
        %v1761 = vld [vmem:[%s1756 + $0x30] sm:$0xff]
        %v1762 = vld [vmem:[%s1756 + $0x38] sm:$0xff]
        %v1763 = vld [vmem:[%s1756 + $0x48] sm:$0xff]
        %v1764 = vld [vmem:[%s1756 + $0x50] sm:$0xff]
        %v1765 = vld [vmem:[%s1756 + $0x60] sm:$0xff]
        %v1766 = vld [vmem:[%s1756 + $0x68] sm:$0xff]
        %v1767 = vld [vmem:[%s1756 + $0x78] sm:$0xff]
        %v1768 = vld [vmem:[%s1756 + $0x80] sm:$0xff]
        %v1769 = vld [vmem:[%s1756 + $0x90] sm:$0xff]
        %v1770 = vld [vmem:[%s1756 + $0x98] sm:$0xff]
        %v1771 = vld [vmem:[%s1756 + $0xa8] sm:$0xff]
        %v1772 = vld [vmem:[%s1756 + $0xb0] sm:$0xff]
        %v1773 = vld [vmem:[%s1756 + $0xc0] sm:$0xff]
        %v1774 = vld [vmem:[%s1756 + $0xc8] sm:$0xff]
        %v1775 = vld [vmem:[%s1756 + $0xd8] sm:$0xff]
        %v1776 = vld [vmem:[%s1756 + $0xe0] sm:$0xff]
        %v1777 = vld [vmem:[%s1756 + $0xf0] sm:$0xff]
        %v1778 = vld [vmem:[%s1756 + $0xf8] sm:$0xff]
        %v1779 = vld [vmem:[%s1756 + $0x108] sm:$0xff]
        %v1780 = vld [vmem:[%s1756 + $0x110] sm:$0xff]
        %v1781 = vld [vmem:[%s1756 + $0x120] sm:$0xff]
        %v1782 = vld [vmem:[%s1756 + $0x128] sm:$0xff]
        %v1783 = vld [vmem:[%s1756 + $0x138] sm:$0xff]
        %v1784 = vld [vmem:[%s1756 + $0x140] sm:$0xff]
        %v1785 = vld [vmem:[%s1756 + $0x150] sm:$0xff]
        %v1786 = vld [vmem:[%s1756 + $0x158] sm:$0xff]
        %v1787 = vld [vmem:[%s1756 + $0x168] sm:$0xff]
        %v1788 = vld [vmem:[%s1756 + $0x170] sm:$0xff]
        %s1789 = scalar_lea.vmem %s1, 48
        %v1790 = vld [vmem:[%s1789] sm:$0xff]
        %v1792 = vsel %vm236, %v1757, 0
        %v1795 = vsel %vm236, %v1758, 0
        %v1798 = vsel %vm236, %v1759, 0
        %v1801 = vsel %vm236, %v1760, 0
        %v1804 = vsel %vm236, %v1761, 0
        %v1807 = vsel %vm236, %v1762, 0
        %v1810 = vsel %vm236, %v1763, 0
        %v1813 = vsel %vm236, %v1764, 0
        %v1816 = vsel %vm236, %v1765, 0
        %v1819 = vsel %vm236, %v1766, 0
        %v1822 = vsel %vm236, %v1767, 0
        %v1825 = vsel %vm236, %v1768, 0
        %v1828 = vsel %vm236, %v1769, 0
        %v1831 = vsel %vm236, %v1770, 0
        %v1834 = vsel %vm236, %v1771, 0
        %v1837 = vsel %vm236, %v1772, 0
        %v1840 = vsel %vm236, %v1773, 0
        %v1843 = vsel %vm236, %v1774, 0
        %v1846 = vsel %vm236, %v1775, 0
        %v1849 = vsel %vm236, %v1776, 0
        %v1852 = vsel %vm236, %v1777, 0
        %v1855 = vsel %vm236, %v1778, 0
        %v1858 = vsel %vm236, %v1779, 0
        %v1861 = vsel %vm236, %v1780, 0
        %v1864 = vsel %vm236, %v1781, 0
        %v1867 = vsel %vm236, %v1782, 0
        %v1870 = vsel %vm236, %v1783, 0
        %v1873 = vsel %vm236, %v1784, 0
        %v1876 = vsel %vm236, %v1785, 0
        %v1879 = vsel %vm236, %v1786, 0
        %v1882 = vsel %vm236, %v1787, 0
        %v1885 = vsel %vm236, %v1788, 0
        %1887 = vmatpush.msra.mxu0 0.0
        %1888 = vmatpush.msra.mxu0 0.0
        %1889 = vmatpush.msra.mxu0 0.0
        %1890 = vmatpush.msra.mxu0 0.0
        %1891 = vmatpush.msra.mxu0 0.0
        %1892 = vmatpush.msra.mxu0 0.0
        %1893 = vmatpush.msra.mxu0 0.0
        %1894 = vmatpush.msra.mxu0 0.0
        %1895 = vmatpush.msra.mxu0 0.0
        %1896 = vmatpush.msra.mxu0 0.0
        %1897 = vmatpush.msra.mxu0 0.0
        %1898 = vmatpush.msra.mxu0 0.0
        %1899 = vmatpush.msra.mxu0 0.0
        %1900 = vmatpush.msra.mxu0 0.0
        %1901 = vmatpush.msra.mxu0 0.0
        %1902 = vmatpush.msra.mxu0 %v1790
        %1903 = vmatmul.f32.gmra.mxu0 %v1792
        %v1904 = vpop.f32.mrf.mxu0
        %v1905 = vadd.f32 0.0, %v1904
        %1906 = vmatmul.f32.gmra.mxu0 %v1795
        %v1907 = vpop.f32.mrf.mxu0
        %v1908 = vadd.f32 0.0, %v1907
        %1909 = vmatmul.f32.gmra.mxu0 %v1798
        %v1910 = vpop.f32.mrf.mxu0
        %v1911 = vadd.f32 0.0, %v1910
        %1912 = vmatmul.f32.gmra.mxu0 %v1801
        %v1913 = vpop.f32.mrf.mxu0
        %v1914 = vadd.f32 0.0, %v1913
        %1915 = vmatmul.f32.gmra.mxu0 %v1804
        %v1916 = vpop.f32.mrf.mxu0
        %v1917 = vadd.f32 0.0, %v1916
        %1918 = vmatmul.f32.gmra.mxu0 %v1807
        %v1919 = vpop.f32.mrf.mxu0
        %v1920 = vadd.f32 0.0, %v1919
        %1921 = vmatmul.f32.gmra.mxu0 %v1810
        %v1922 = vpop.f32.mrf.mxu0
        %v1923 = vadd.f32 0.0, %v1922
        %1924 = vmatmul.f32.gmra.mxu0 %v1813
        %v1925 = vpop.f32.mrf.mxu0
        %v1926 = vadd.f32 0.0, %v1925
        %1927 = vmatmul.f32.gmra.mxu0 %v1816
        %v1928 = vpop.f32.mrf.mxu0
        %v1929 = vadd.f32 0.0, %v1928
        %1930 = vmatmul.f32.gmra.mxu0 %v1819
        %v1931 = vpop.f32.mrf.mxu0
        %v1932 = vadd.f32 0.0, %v1931
        %1933 = vmatmul.f32.gmra.mxu0 %v1822
        %v1934 = vpop.f32.mrf.mxu0
        %v1935 = vadd.f32 0.0, %v1934
        %1936 = vmatmul.f32.gmra.mxu0 %v1825
        %v1937 = vpop.f32.mrf.mxu0
        %v1938 = vadd.f32 0.0, %v1937
        %1939 = vmatmul.f32.gmra.mxu0 %v1828
        %v1940 = vpop.f32.mrf.mxu0
        %v1941 = vadd.f32 0.0, %v1940
        %1942 = vmatmul.f32.gmra.mxu0 %v1831
        %v1943 = vpop.f32.mrf.mxu0
        %v1944 = vadd.f32 0.0, %v1943
        %1945 = vmatmul.f32.gmra.mxu0 %v1834
        %v1946 = vpop.f32.mrf.mxu0
        %v1947 = vadd.f32 0.0, %v1946
        %1948 = vmatmul.f32.gmra.mxu0 %v1837
        %v1949 = vpop.f32.mrf.mxu0
        %v1950 = vadd.f32 0.0, %v1949
        %1951 = vmatmul.f32.gmra.mxu0 %v1840
        %v1952 = vpop.f32.mrf.mxu0
        %v1953 = vadd.f32 0.0, %v1952
        %1954 = vmatmul.f32.gmra.mxu0 %v1843
        %v1955 = vpop.f32.mrf.mxu0
        %v1956 = vadd.f32 0.0, %v1955
        %1957 = vmatmul.f32.gmra.mxu0 %v1846
        %v1958 = vpop.f32.mrf.mxu0
        %v1959 = vadd.f32 0.0, %v1958
        %1960 = vmatmul.f32.gmra.mxu0 %v1849
        %v1961 = vpop.f32.mrf.mxu0
        %v1962 = vadd.f32 0.0, %v1961
        %1963 = vmatmul.f32.gmra.mxu0 %v1852
        %v1964 = vpop.f32.mrf.mxu0
        %v1965 = vadd.f32 0.0, %v1964
        %1966 = vmatmul.f32.gmra.mxu0 %v1855
        %v1967 = vpop.f32.mrf.mxu0
        %v1968 = vadd.f32 0.0, %v1967
        %1969 = vmatmul.f32.gmra.mxu0 %v1858
        %v1970 = vpop.f32.mrf.mxu0
        %v1971 = vadd.f32 0.0, %v1970
        %1972 = vmatmul.f32.gmra.mxu0 %v1861
        %v1973 = vpop.f32.mrf.mxu0
        %v1974 = vadd.f32 0.0, %v1973
        %1975 = vmatmul.f32.gmra.mxu0 %v1864
        %v1976 = vpop.f32.mrf.mxu0
        %v1977 = vadd.f32 0.0, %v1976
        %1978 = vmatmul.f32.gmra.mxu0 %v1867
        %v1979 = vpop.f32.mrf.mxu0
        %v1980 = vadd.f32 0.0, %v1979
        %1981 = vmatmul.f32.gmra.mxu0 %v1870
        %v1982 = vpop.f32.mrf.mxu0
        %v1983 = vadd.f32 0.0, %v1982
        %1984 = vmatmul.f32.gmra.mxu0 %v1873
        %v1985 = vpop.f32.mrf.mxu0
        %v1986 = vadd.f32 0.0, %v1985
        %1987 = vmatmul.f32.gmra.mxu0 %v1876
        %v1988 = vpop.f32.mrf.mxu0
        %v1989 = vadd.f32 0.0, %v1988
        %1990 = vmatmul.f32.gmra.mxu0 %v1879
        %v1991 = vpop.f32.mrf.mxu0
        %v1992 = vadd.f32 0.0, %v1991
        %1993 = vmatmul.f32.gmra.mxu0 %v1882
        %v1994 = vpop.f32.mrf.mxu0
        %v1995 = vadd.f32 0.0, %v1994
        %1996 = vmatmul.f32.gmra.mxu0 %v1885
        %v1997 = vpop.f32.mrf.mxu0
        %v1998 = vadd.f32 0.0, %v1997
        %1999 = vdwg.mxu0
        %v2000 = vadd.f32 %v1724, %v1905
        %v2001 = vadd.f32 %v1725, %v1908
        %v2002 = vadd.f32 %v1726, %v1911
        %v2003 = vadd.f32 %v1727, %v1914
        %v2004 = vadd.f32 %v1728, %v1917
        %v2005 = vadd.f32 %v1729, %v1920
        %v2006 = vadd.f32 %v1730, %v1923
        %v2007 = vadd.f32 %v1731, %v1926
        %v2008 = vadd.f32 %v1732, %v1929
        %v2009 = vadd.f32 %v1733, %v1932
        %v2010 = vadd.f32 %v1734, %v1935
        %v2011 = vadd.f32 %v1735, %v1938
        %v2012 = vadd.f32 %v1736, %v1941
        %v2013 = vadd.f32 %v1737, %v1944
        %v2014 = vadd.f32 %v1738, %v1947
        %v2015 = vadd.f32 %v1739, %v1950
        %v2016 = vadd.f32 %v1740, %v1953
        %v2017 = vadd.f32 %v1741, %v1956
        %v2018 = vadd.f32 %v1742, %v1959
        %v2019 = vadd.f32 %v1743, %v1962
        %v2020 = vadd.f32 %v1744, %v1965
        %v2021 = vadd.f32 %v1745, %v1968
        %v2022 = vadd.f32 %v1746, %v1971
        %v2023 = vadd.f32 %v1747, %v1974
        %v2024 = vadd.f32 %v1748, %v1977
        %v2025 = vadd.f32 %v1749, %v1980
        %v2026 = vadd.f32 %v1750, %v1983
        %v2027 = vadd.f32 %v1751, %v1986
        %v2028 = vadd.f32 %v1752, %v1989
        %v2029 = vadd.f32 %v1753, %v1992
        %v2030 = vadd.f32 %v1754, %v1995
        %v2031 = vadd.f32 %v1755, %v1998
        %v2032 = vld [vmem:[%s1756 + $0x1] sm:$0xff]
        %v2033 = vld [vmem:[%s1756 + $0x9] sm:$0xff]
        %v2034 = vld [vmem:[%s1756 + $0x19] sm:$0xff]
        %v2035 = vld [vmem:[%s1756 + $0x21] sm:$0xff]
        %v2036 = vld [vmem:[%s1756 + $0x31] sm:$0xff]
        %v2037 = vld [vmem:[%s1756 + $0x39] sm:$0xff]
        %v2038 = vld [vmem:[%s1756 + $0x49] sm:$0xff]
        %v2039 = vld [vmem:[%s1756 + $0x51] sm:$0xff]
        %v2040 = vld [vmem:[%s1756 + $0x61] sm:$0xff]
        %v2041 = vld [vmem:[%s1756 + $0x69] sm:$0xff]
        %v2042 = vld [vmem:[%s1756 + $0x79] sm:$0xff]
        %v2043 = vld [vmem:[%s1756 + $0x81] sm:$0xff]
        %v2044 = vld [vmem:[%s1756 + $0x91] sm:$0xff]
        %v2045 = vld [vmem:[%s1756 + $0x99] sm:$0xff]
        %v2046 = vld [vmem:[%s1756 + $0xa9] sm:$0xff]
        %v2047 = vld [vmem:[%s1756 + $0xb1] sm:$0xff]
        %v2048 = vld [vmem:[%s1756 + $0xc1] sm:$0xff]
        %v2049 = vld [vmem:[%s1756 + $0xc9] sm:$0xff]
        %v2050 = vld [vmem:[%s1756 + $0xd9] sm:$0xff]
        %v2051 = vld [vmem:[%s1756 + $0xe1] sm:$0xff]
        %v2052 = vld [vmem:[%s1756 + $0xf1] sm:$0xff]
        %v2053 = vld [vmem:[%s1756 + $0xf9] sm:$0xff]
        %v2054 = vld [vmem:[%s1756 + $0x109] sm:$0xff]
        %v2055 = vld [vmem:[%s1756 + $0x111] sm:$0xff]
        %v2056 = vld [vmem:[%s1756 + $0x121] sm:$0xff]
        %v2057 = vld [vmem:[%s1756 + $0x129] sm:$0xff]
        %v2058 = vld [vmem:[%s1756 + $0x139] sm:$0xff]
        %v2059 = vld [vmem:[%s1756 + $0x141] sm:$0xff]
        %v2060 = vld [vmem:[%s1756 + $0x151] sm:$0xff]
        %v2061 = vld [vmem:[%s1756 + $0x159] sm:$0xff]
        %v2062 = vld [vmem:[%s1756 + $0x169] sm:$0xff]
        %v2063 = vld [vmem:[%s1756 + $0x171] sm:$0xff]
        %s2064 = scalar_lea.vmem %s1, 56
        %v2065 = vld [vmem:[%s2064] sm:$0xff]
        %v2067 = vsel %vm236, %v2032, 0
        %v2070 = vsel %vm236, %v2033, 0
        %v2073 = vsel %vm236, %v2034, 0
        %v2076 = vsel %vm236, %v2035, 0
        %v2079 = vsel %vm236, %v2036, 0
        %v2082 = vsel %vm236, %v2037, 0
        %v2085 = vsel %vm236, %v2038, 0
        %v2088 = vsel %vm236, %v2039, 0
        %v2091 = vsel %vm236, %v2040, 0
        %v2094 = vsel %vm236, %v2041, 0
        %v2097 = vsel %vm236, %v2042, 0
        %v2100 = vsel %vm236, %v2043, 0
        %v2103 = vsel %vm236, %v2044, 0
        %v2106 = vsel %vm236, %v2045, 0
        %v2109 = vsel %vm236, %v2046, 0
        %v2112 = vsel %vm236, %v2047, 0
        %v2115 = vsel %vm236, %v2048, 0
        %v2118 = vsel %vm236, %v2049, 0
        %v2121 = vsel %vm236, %v2050, 0
        %v2124 = vsel %vm236, %v2051, 0
        %v2127 = vsel %vm236, %v2052, 0
        %v2130 = vsel %vm236, %v2053, 0
        %v2133 = vsel %vm236, %v2054, 0
        %v2136 = vsel %vm236, %v2055, 0
        %v2139 = vsel %vm236, %v2056, 0
        %v2142 = vsel %vm236, %v2057, 0
        %v2145 = vsel %vm236, %v2058, 0
        %v2148 = vsel %vm236, %v2059, 0
        %v2151 = vsel %vm236, %v2060, 0
        %v2154 = vsel %vm236, %v2061, 0
        %v2157 = vsel %vm236, %v2062, 0
        %v2160 = vsel %vm236, %v2063, 0
        %2162 = vmatpush.msra.mxu0 0.0
        %2163 = vmatpush.msra.mxu0 0.0
        %2164 = vmatpush.msra.mxu0 0.0
        %2165 = vmatpush.msra.mxu0 0.0
        %2166 = vmatpush.msra.mxu0 0.0
        %2167 = vmatpush.msra.mxu0 0.0
        %2168 = vmatpush.msra.mxu0 0.0
        %2169 = vmatpush.msra.mxu0 0.0
        %2170 = vmatpush.msra.mxu0 0.0
        %2171 = vmatpush.msra.mxu0 0.0
        %2172 = vmatpush.msra.mxu0 0.0
        %2173 = vmatpush.msra.mxu0 0.0
        %2174 = vmatpush.msra.mxu0 0.0
        %2175 = vmatpush.msra.mxu0 0.0
        %2176 = vmatpush.msra.mxu0 0.0
        %2177 = vmatpush.msra.mxu0 %v2065
        %2178 = vmatmul.f32.gmra.mxu0 %v2067
        %v2179 = vpop.f32.mrf.mxu0
        %v2180 = vadd.f32 0.0, %v2179
        %2181 = vmatmul.f32.gmra.mxu0 %v2070
        %v2182 = vpop.f32.mrf.mxu0
        %v2183 = vadd.f32 0.0, %v2182
        %2184 = vmatmul.f32.gmra.mxu0 %v2073
        %v2185 = vpop.f32.mrf.mxu0
        %v2186 = vadd.f32 0.0, %v2185
        %2187 = vmatmul.f32.gmra.mxu0 %v2076
        %v2188 = vpop.f32.mrf.mxu0
        %v2189 = vadd.f32 0.0, %v2188
        %2190 = vmatmul.f32.gmra.mxu0 %v2079
        %v2191 = vpop.f32.mrf.mxu0
        %v2192 = vadd.f32 0.0, %v2191
        %2193 = vmatmul.f32.gmra.mxu0 %v2082
        %v2194 = vpop.f32.mrf.mxu0
        %v2195 = vadd.f32 0.0, %v2194
        %2196 = vmatmul.f32.gmra.mxu0 %v2085
        %v2197 = vpop.f32.mrf.mxu0
        %v2198 = vadd.f32 0.0, %v2197
        %2199 = vmatmul.f32.gmra.mxu0 %v2088
        %v2200 = vpop.f32.mrf.mxu0
        %v2201 = vadd.f32 0.0, %v2200
        %2202 = vmatmul.f32.gmra.mxu0 %v2091
        %v2203 = vpop.f32.mrf.mxu0
        %v2204 = vadd.f32 0.0, %v2203
        %2205 = vmatmul.f32.gmra.mxu0 %v2094
        %v2206 = vpop.f32.mrf.mxu0
        %v2207 = vadd.f32 0.0, %v2206
        %2208 = vmatmul.f32.gmra.mxu0 %v2097
        %v2209 = vpop.f32.mrf.mxu0
        %v2210 = vadd.f32 0.0, %v2209
        %2211 = vmatmul.f32.gmra.mxu0 %v2100
        %v2212 = vpop.f32.mrf.mxu0
        %v2213 = vadd.f32 0.0, %v2212
        %2214 = vmatmul.f32.gmra.mxu0 %v2103
        %v2215 = vpop.f32.mrf.mxu0
        %v2216 = vadd.f32 0.0, %v2215
        %2217 = vmatmul.f32.gmra.mxu0 %v2106
        %v2218 = vpop.f32.mrf.mxu0
        %v2219 = vadd.f32 0.0, %v2218
        %2220 = vmatmul.f32.gmra.mxu0 %v2109
        %v2221 = vpop.f32.mrf.mxu0
        %v2222 = vadd.f32 0.0, %v2221
        %2223 = vmatmul.f32.gmra.mxu0 %v2112
        %v2224 = vpop.f32.mrf.mxu0
        %v2225 = vadd.f32 0.0, %v2224
        %2226 = vmatmul.f32.gmra.mxu0 %v2115
        %v2227 = vpop.f32.mrf.mxu0
        %v2228 = vadd.f32 0.0, %v2227
        %2229 = vmatmul.f32.gmra.mxu0 %v2118
        %v2230 = vpop.f32.mrf.mxu0
        %v2231 = vadd.f32 0.0, %v2230
        %2232 = vmatmul.f32.gmra.mxu0 %v2121
        %v2233 = vpop.f32.mrf.mxu0
        %v2234 = vadd.f32 0.0, %v2233
        %2235 = vmatmul.f32.gmra.mxu0 %v2124
        %v2236 = vpop.f32.mrf.mxu0
        %v2237 = vadd.f32 0.0, %v2236
        %2238 = vmatmul.f32.gmra.mxu0 %v2127
        %v2239 = vpop.f32.mrf.mxu0
        %v2240 = vadd.f32 0.0, %v2239
        %2241 = vmatmul.f32.gmra.mxu0 %v2130
        %v2242 = vpop.f32.mrf.mxu0
        %v2243 = vadd.f32 0.0, %v2242
        %2244 = vmatmul.f32.gmra.mxu0 %v2133
        %v2245 = vpop.f32.mrf.mxu0
        %v2246 = vadd.f32 0.0, %v2245
        %2247 = vmatmul.f32.gmra.mxu0 %v2136
        %v2248 = vpop.f32.mrf.mxu0
        %v2249 = vadd.f32 0.0, %v2248
        %2250 = vmatmul.f32.gmra.mxu0 %v2139
        %v2251 = vpop.f32.mrf.mxu0
        %v2252 = vadd.f32 0.0, %v2251
        %2253 = vmatmul.f32.gmra.mxu0 %v2142
        %v2254 = vpop.f32.mrf.mxu0
        %v2255 = vadd.f32 0.0, %v2254
        %2256 = vmatmul.f32.gmra.mxu0 %v2145
        %v2257 = vpop.f32.mrf.mxu0
        %v2258 = vadd.f32 0.0, %v2257
        %2259 = vmatmul.f32.gmra.mxu0 %v2148
        %v2260 = vpop.f32.mrf.mxu0
        %v2261 = vadd.f32 0.0, %v2260
        %2262 = vmatmul.f32.gmra.mxu0 %v2151
        %v2263 = vpop.f32.mrf.mxu0
        %v2264 = vadd.f32 0.0, %v2263
        %2265 = vmatmul.f32.gmra.mxu0 %v2154
        %v2266 = vpop.f32.mrf.mxu0
        %v2267 = vadd.f32 0.0, %v2266
        %2268 = vmatmul.f32.gmra.mxu0 %v2157
        %v2269 = vpop.f32.mrf.mxu0
        %v2270 = vadd.f32 0.0, %v2269
        %2271 = vmatmul.f32.gmra.mxu0 %v2160
        %v2272 = vpop.f32.mrf.mxu0
        %v2273 = vadd.f32 0.0, %v2272
        %2274 = vdwg.mxu0
        %v2275 = vadd.f32 %v2000, %v2180
        %v2276 = vadd.f32 %v2001, %v2183
        %v2277 = vadd.f32 %v2002, %v2186
        %v2278 = vadd.f32 %v2003, %v2189
        %v2279 = vadd.f32 %v2004, %v2192
        %v2280 = vadd.f32 %v2005, %v2195
        %v2281 = vadd.f32 %v2006, %v2198
        %v2282 = vadd.f32 %v2007, %v2201
        %v2283 = vadd.f32 %v2008, %v2204
        %v2284 = vadd.f32 %v2009, %v2207
        %v2285 = vadd.f32 %v2010, %v2210
        %v2286 = vadd.f32 %v2011, %v2213
        %v2287 = vadd.f32 %v2012, %v2216
        %v2288 = vadd.f32 %v2013, %v2219
        %v2289 = vadd.f32 %v2014, %v2222
        %v2290 = vadd.f32 %v2015, %v2225
        %v2291 = vadd.f32 %v2016, %v2228
        %v2292 = vadd.f32 %v2017, %v2231
        %v2293 = vadd.f32 %v2018, %v2234
        %v2294 = vadd.f32 %v2019, %v2237
        %v2295 = vadd.f32 %v2020, %v2240
        %v2296 = vadd.f32 %v2021, %v2243
        %v2297 = vadd.f32 %v2022, %v2246
        %v2298 = vadd.f32 %v2023, %v2249
        %v2299 = vadd.f32 %v2024, %v2252
        %v2300 = vadd.f32 %v2025, %v2255
        %v2301 = vadd.f32 %v2026, %v2258
        %v2302 = vadd.f32 %v2027, %v2261
        %v2303 = vadd.f32 %v2028, %v2264
        %v2304 = vadd.f32 %v2029, %v2267
        %v2305 = vadd.f32 %v2030, %v2270
        %v2306 = vadd.f32 %v2031, %v2273
        %v2307 = vld [vmem:[%s1756 + $0x2] sm:$0xff]
        %v2308 = vld [vmem:[%s1756 + $0xa] sm:$0xff]
        %v2309 = vld [vmem:[%s1756 + $0x1a] sm:$0xff]
        %v2310 = vld [vmem:[%s1756 + $0x22] sm:$0xff]
        %v2311 = vld [vmem:[%s1756 + $0x32] sm:$0xff]
        %v2312 = vld [vmem:[%s1756 + $0x3a] sm:$0xff]
        %v2313 = vld [vmem:[%s1756 + $0x4a] sm:$0xff]
        %v2314 = vld [vmem:[%s1756 + $0x52] sm:$0xff]
        %v2315 = vld [vmem:[%s1756 + $0x62] sm:$0xff]
        %v2316 = vld [vmem:[%s1756 + $0x6a] sm:$0xff]
        %v2317 = vld [vmem:[%s1756 + $0x7a] sm:$0xff]
        %v2318 = vld [vmem:[%s1756 + $0x82] sm:$0xff]
        %v2319 = vld [vmem:[%s1756 + $0x92] sm:$0xff]
        %v2320 = vld [vmem:[%s1756 + $0x9a] sm:$0xff]
        %v2321 = vld [vmem:[%s1756 + $0xaa] sm:$0xff]
        %v2322 = vld [vmem:[%s1756 + $0xb2] sm:$0xff]
        %v2323 = vld [vmem:[%s1756 + $0xc2] sm:$0xff]
        %v2324 = vld [vmem:[%s1756 + $0xca] sm:$0xff]
        %v2325 = vld [vmem:[%s1756 + $0xda] sm:$0xff]
        %v2326 = vld [vmem:[%s1756 + $0xe2] sm:$0xff]
        %v2327 = vld [vmem:[%s1756 + $0xf2] sm:$0xff]
        %v2328 = vld [vmem:[%s1756 + $0xfa] sm:$0xff]
        %v2329 = vld [vmem:[%s1756 + $0x10a] sm:$0xff]
        %v2330 = vld [vmem:[%s1756 + $0x112] sm:$0xff]
        %v2331 = vld [vmem:[%s1756 + $0x122] sm:$0xff]
        %v2332 = vld [vmem:[%s1756 + $0x12a] sm:$0xff]
        %v2333 = vld [vmem:[%s1756 + $0x13a] sm:$0xff]
        %v2334 = vld [vmem:[%s1756 + $0x142] sm:$0xff]
        %v2335 = vld [vmem:[%s1756 + $0x152] sm:$0xff]
        %v2336 = vld [vmem:[%s1756 + $0x15a] sm:$0xff]
        %v2337 = vld [vmem:[%s1756 + $0x16a] sm:$0xff]
        %v2338 = vld [vmem:[%s1756 + $0x172] sm:$0xff]
        %s2339 = scalar_lea.vmem %s1, 64
        %v2340 = vld [vmem:[%s2339] sm:$0xff]
        %v2342 = vsel %vm236, %v2307, 0
        %v2345 = vsel %vm236, %v2308, 0
        %v2348 = vsel %vm236, %v2309, 0
        %v2351 = vsel %vm236, %v2310, 0
        %v2354 = vsel %vm236, %v2311, 0
        %v2357 = vsel %vm236, %v2312, 0
        %v2360 = vsel %vm236, %v2313, 0
        %v2363 = vsel %vm236, %v2314, 0
        %v2366 = vsel %vm236, %v2315, 0
        %v2369 = vsel %vm236, %v2316, 0
        %v2372 = vsel %vm236, %v2317, 0
        %v2375 = vsel %vm236, %v2318, 0
        %v2378 = vsel %vm236, %v2319, 0
        %v2381 = vsel %vm236, %v2320, 0
        %v2384 = vsel %vm236, %v2321, 0
        %v2387 = vsel %vm236, %v2322, 0
        %v2390 = vsel %vm236, %v2323, 0
        %v2393 = vsel %vm236, %v2324, 0
        %v2396 = vsel %vm236, %v2325, 0
        %v2399 = vsel %vm236, %v2326, 0
        %v2402 = vsel %vm236, %v2327, 0
        %v2405 = vsel %vm236, %v2328, 0
        %v2408 = vsel %vm236, %v2329, 0
        %v2411 = vsel %vm236, %v2330, 0
        %v2414 = vsel %vm236, %v2331, 0
        %v2417 = vsel %vm236, %v2332, 0
        %v2420 = vsel %vm236, %v2333, 0
        %v2423 = vsel %vm236, %v2334, 0
        %v2426 = vsel %vm236, %v2335, 0
        %v2429 = vsel %vm236, %v2336, 0
        %v2432 = vsel %vm236, %v2337, 0
        %v2435 = vsel %vm236, %v2338, 0
        %2437 = vmatpush.msra.mxu0 0.0
        %2438 = vmatpush.msra.mxu0 0.0
        %2439 = vmatpush.msra.mxu0 0.0
        %2440 = vmatpush.msra.mxu0 0.0
        %2441 = vmatpush.msra.mxu0 0.0
        %2442 = vmatpush.msra.mxu0 0.0
        %2443 = vmatpush.msra.mxu0 0.0
        %2444 = vmatpush.msra.mxu0 0.0
        %2445 = vmatpush.msra.mxu0 0.0
        %2446 = vmatpush.msra.mxu0 0.0
        %2447 = vmatpush.msra.mxu0 0.0
        %2448 = vmatpush.msra.mxu0 0.0
        %2449 = vmatpush.msra.mxu0 0.0
        %2450 = vmatpush.msra.mxu0 0.0
        %2451 = vmatpush.msra.mxu0 0.0
        %2452 = vmatpush.msra.mxu0 %v2340
        %2453 = vmatmul.f32.gmra.mxu0 %v2342
        %v2454 = vpop.f32.mrf.mxu0
        %v2455 = vadd.f32 0.0, %v2454
        %2456 = vmatmul.f32.gmra.mxu0 %v2345
        %v2457 = vpop.f32.mrf.mxu0
        %v2458 = vadd.f32 0.0, %v2457
        %2459 = vmatmul.f32.gmra.mxu0 %v2348
        %v2460 = vpop.f32.mrf.mxu0
        %v2461 = vadd.f32 0.0, %v2460
        %2462 = vmatmul.f32.gmra.mxu0 %v2351
        %v2463 = vpop.f32.mrf.mxu0
        %v2464 = vadd.f32 0.0, %v2463
        %2465 = vmatmul.f32.gmra.mxu0 %v2354
        %v2466 = vpop.f32.mrf.mxu0
        %v2467 = vadd.f32 0.0, %v2466
        %2468 = vmatmul.f32.gmra.mxu0 %v2357
        %v2469 = vpop.f32.mrf.mxu0
        %v2470 = vadd.f32 0.0, %v2469
        %2471 = vmatmul.f32.gmra.mxu0 %v2360
        %v2472 = vpop.f32.mrf.mxu0
        %v2473 = vadd.f32 0.0, %v2472
        %2474 = vmatmul.f32.gmra.mxu0 %v2363
        %v2475 = vpop.f32.mrf.mxu0
        %v2476 = vadd.f32 0.0, %v2475
        %2477 = vmatmul.f32.gmra.mxu0 %v2366
        %v2478 = vpop.f32.mrf.mxu0
        %v2479 = vadd.f32 0.0, %v2478
        %2480 = vmatmul.f32.gmra.mxu0 %v2369
        %v2481 = vpop.f32.mrf.mxu0
        %v2482 = vadd.f32 0.0, %v2481
        %2483 = vmatmul.f32.gmra.mxu0 %v2372
        %v2484 = vpop.f32.mrf.mxu0
        %v2485 = vadd.f32 0.0, %v2484
        %2486 = vmatmul.f32.gmra.mxu0 %v2375
        %v2487 = vpop.f32.mrf.mxu0
        %v2488 = vadd.f32 0.0, %v2487
        %2489 = vmatmul.f32.gmra.mxu0 %v2378
        %v2490 = vpop.f32.mrf.mxu0
        %v2491 = vadd.f32 0.0, %v2490
        %2492 = vmatmul.f32.gmra.mxu0 %v2381
        %v2493 = vpop.f32.mrf.mxu0
        %v2494 = vadd.f32 0.0, %v2493
        %2495 = vmatmul.f32.gmra.mxu0 %v2384
        %v2496 = vpop.f32.mrf.mxu0
        %v2497 = vadd.f32 0.0, %v2496
        %2498 = vmatmul.f32.gmra.mxu0 %v2387
        %v2499 = vpop.f32.mrf.mxu0
        %v2500 = vadd.f32 0.0, %v2499
        %2501 = vmatmul.f32.gmra.mxu0 %v2390
        %v2502 = vpop.f32.mrf.mxu0
        %v2503 = vadd.f32 0.0, %v2502
        %2504 = vmatmul.f32.gmra.mxu0 %v2393
        %v2505 = vpop.f32.mrf.mxu0
        %v2506 = vadd.f32 0.0, %v2505
        %2507 = vmatmul.f32.gmra.mxu0 %v2396
        %v2508 = vpop.f32.mrf.mxu0
        %v2509 = vadd.f32 0.0, %v2508
        %2510 = vmatmul.f32.gmra.mxu0 %v2399
        %v2511 = vpop.f32.mrf.mxu0
        %v2512 = vadd.f32 0.0, %v2511
        %2513 = vmatmul.f32.gmra.mxu0 %v2402
        %v2514 = vpop.f32.mrf.mxu0
        %v2515 = vadd.f32 0.0, %v2514
        %2516 = vmatmul.f32.gmra.mxu0 %v2405
        %v2517 = vpop.f32.mrf.mxu0
        %v2518 = vadd.f32 0.0, %v2517
        %2519 = vmatmul.f32.gmra.mxu0 %v2408
        %v2520 = vpop.f32.mrf.mxu0
        %v2521 = vadd.f32 0.0, %v2520
        %2522 = vmatmul.f32.gmra.mxu0 %v2411
        %v2523 = vpop.f32.mrf.mxu0
        %v2524 = vadd.f32 0.0, %v2523
        %2525 = vmatmul.f32.gmra.mxu0 %v2414
        %v2526 = vpop.f32.mrf.mxu0
        %v2527 = vadd.f32 0.0, %v2526
        %2528 = vmatmul.f32.gmra.mxu0 %v2417
        %v2529 = vpop.f32.mrf.mxu0
        %v2530 = vadd.f32 0.0, %v2529
        %2531 = vmatmul.f32.gmra.mxu0 %v2420
        %v2532 = vpop.f32.mrf.mxu0
        %v2533 = vadd.f32 0.0, %v2532
        %2534 = vmatmul.f32.gmra.mxu0 %v2423
        %v2535 = vpop.f32.mrf.mxu0
        %v2536 = vadd.f32 0.0, %v2535
        %2537 = vmatmul.f32.gmra.mxu0 %v2426
        %v2538 = vpop.f32.mrf.mxu0
        %v2539 = vadd.f32 0.0, %v2538
        %2540 = vmatmul.f32.gmra.mxu0 %v2429
        %v2541 = vpop.f32.mrf.mxu0
        %v2542 = vadd.f32 0.0, %v2541
        %2543 = vmatmul.f32.gmra.mxu0 %v2432
        %v2544 = vpop.f32.mrf.mxu0
        %v2545 = vadd.f32 0.0, %v2544
        %2546 = vmatmul.f32.gmra.mxu0 %v2435
        %v2547 = vpop.f32.mrf.mxu0
        %v2548 = vadd.f32 0.0, %v2547
        %2549 = vdwg.mxu0
        %v2550 = vadd.f32 %v2275, %v2455
        %v2551 = vadd.f32 %v2276, %v2458
        %v2552 = vadd.f32 %v2277, %v2461
        %v2553 = vadd.f32 %v2278, %v2464
        %v2554 = vadd.f32 %v2279, %v2467
        %v2555 = vadd.f32 %v2280, %v2470
        %v2556 = vadd.f32 %v2281, %v2473
        %v2557 = vadd.f32 %v2282, %v2476
        %v2558 = vadd.f32 %v2283, %v2479
        %v2559 = vadd.f32 %v2284, %v2482
        %v2560 = vadd.f32 %v2285, %v2485
        %v2561 = vadd.f32 %v2286, %v2488
        %v2562 = vadd.f32 %v2287, %v2491
        %v2563 = vadd.f32 %v2288, %v2494
        %v2564 = vadd.f32 %v2289, %v2497
        %v2565 = vadd.f32 %v2290, %v2500
        %v2566 = vadd.f32 %v2291, %v2503
        %v2567 = vadd.f32 %v2292, %v2506
        %v2568 = vadd.f32 %v2293, %v2509
        %v2569 = vadd.f32 %v2294, %v2512
        %v2570 = vadd.f32 %v2295, %v2515
        %v2571 = vadd.f32 %v2296, %v2518
        %v2572 = vadd.f32 %v2297, %v2521
        %v2573 = vadd.f32 %v2298, %v2524
        %v2574 = vadd.f32 %v2299, %v2527
        %v2575 = vadd.f32 %v2300, %v2530
        %v2576 = vadd.f32 %v2301, %v2533
        %v2577 = vadd.f32 %v2302, %v2536
        %v2578 = vadd.f32 %v2303, %v2539
        %v2579 = vadd.f32 %v2304, %v2542
        %v2580 = vadd.f32 %v2305, %v2545
        %v2581 = vadd.f32 %v2306, %v2548
        %v2582 = vld [vmem:[%s2] sm:$0x1]
        %v2584 = vperm.slane %v2582, 0
        %v2586 = vadd.f32 %v2550, %v2584
        %v2587 = vadd.f32 %v2551, %v2584
        %v2588 = vadd.f32 %v2552, %v2584
        %v2589 = vadd.f32 %v2553, %v2584
        %v2590 = vadd.f32 %v2554, %v2584
        %v2591 = vadd.f32 %v2555, %v2584
        %v2592 = vadd.f32 %v2556, %v2584
        %v2593 = vadd.f32 %v2557, %v2584
        %v2594 = vadd.f32 %v2558, %v2584
        %v2595 = vadd.f32 %v2559, %v2584
        %v2596 = vadd.f32 %v2560, %v2584
        %v2597 = vadd.f32 %v2561, %v2584
        %v2598 = vadd.f32 %v2562, %v2584
        %v2599 = vadd.f32 %v2563, %v2584
        %v2600 = vadd.f32 %v2564, %v2584
        %v2601 = vadd.f32 %v2565, %v2584
        %v2602 = vadd.f32 %v2566, %v2584
        %v2603 = vadd.f32 %v2567, %v2584
        %v2604 = vadd.f32 %v2568, %v2584
        %v2605 = vadd.f32 %v2569, %v2584
        %v2606 = vadd.f32 %v2570, %v2584
        %v2607 = vadd.f32 %v2571, %v2584
        %v2608 = vadd.f32 %v2572, %v2584
        %v2609 = vadd.f32 %v2573, %v2584
        %v2610 = vadd.f32 %v2574, %v2584
        %v2611 = vadd.f32 %v2575, %v2584
        %v2612 = vadd.f32 %v2576, %v2584
        %v2613 = vadd.f32 %v2577, %v2584
        %v2614 = vadd.f32 %v2578, %v2584
        %v2615 = vadd.f32 %v2579, %v2584
        %v2616 = vadd.f32 %v2580, %v2584
        %v2617 = vadd.f32 %v2581, %v2584
        %vm2618 = vcmask 130048
        %2619 = vst.msk [vmem:[%s163] sm:$0xff] %vm2618, %v2586
        %2620 = vst.msk [vmem:[%s163 + $0x8] sm:$0xff] %vm2618, %v2587
        %2621 = vst.msk [vmem:[%s163 + $0x10] sm:$0xff] %vm2618, %v2588
        %2622 = vst.msk [vmem:[%s163 + $0x18] sm:$0xff] %vm2618, %v2589
        %2623 = vst.msk [vmem:[%s163 + $0x20] sm:$0xff] %vm2618, %v2590
        %2624 = vst.msk [vmem:[%s163 + $0x28] sm:$0xff] %vm2618, %v2591
        %2625 = vst.msk [vmem:[%s163 + $0x30] sm:$0xff] %vm2618, %v2592
        %2626 = vst.msk [vmem:[%s163 + $0x38] sm:$0xff] %vm2618, %v2593
        %2627 = vst.msk [vmem:[%s163 + $0x40] sm:$0xff] %vm2618, %v2594
        %2628 = vst.msk [vmem:[%s163 + $0x48] sm:$0xff] %vm2618, %v2595
        %2629 = vst.msk [vmem:[%s163 + $0x50] sm:$0xff] %vm2618, %v2596
        %2630 = vst.msk [vmem:[%s163 + $0x58] sm:$0xff] %vm2618, %v2597
        %2631 = vst.msk [vmem:[%s163 + $0x60] sm:$0xff] %vm2618, %v2598
        %2632 = vst.msk [vmem:[%s163 + $0x68] sm:$0xff] %vm2618, %v2599
        %2633 = vst.msk [vmem:[%s163 + $0x70] sm:$0xff] %vm2618, %v2600
        %2634 = vst.msk [vmem:[%s163 + $0x78] sm:$0xff] %vm2618, %v2601
        %2635 = vst.msk [vmem:[%s163 + $0x80] sm:$0xff] %vm2618, %v2602
        %2636 = vst.msk [vmem:[%s163 + $0x88] sm:$0xff] %vm2618, %v2603
        %2637 = vst.msk [vmem:[%s163 + $0x90] sm:$0xff] %vm2618, %v2604
        %2638 = vst.msk [vmem:[%s163 + $0x98] sm:$0xff] %vm2618, %v2605
        %2639 = vst.msk [vmem:[%s163 + $0xa0] sm:$0xff] %vm2618, %v2606
        %2640 = vst.msk [vmem:[%s163 + $0xa8] sm:$0xff] %vm2618, %v2607
        %2641 = vst.msk [vmem:[%s163 + $0xb0] sm:$0xff] %vm2618, %v2608
        %2642 = vst.msk [vmem:[%s163 + $0xb8] sm:$0xff] %vm2618, %v2609
        %2643 = vst.msk [vmem:[%s163 + $0xc0] sm:$0xff] %vm2618, %v2610
        %2644 = vst.msk [vmem:[%s163 + $0xc8] sm:$0xff] %vm2618, %v2611
        %2645 = vst.msk [vmem:[%s163 + $0xd0] sm:$0xff] %vm2618, %v2612
        %2646 = vst.msk [vmem:[%s163 + $0xd8] sm:$0xff] %vm2618, %v2613
        %2647 = vst.msk [vmem:[%s163 + $0xe0] sm:$0xff] %vm2618, %v2614
        %2648 = vst.msk [vmem:[%s163 + $0xe8] sm:$0xff] %vm2618, %v2615
        %2649 = vst.msk [vmem:[%s163 + $0xf0] sm:$0xff] %vm2618, %v2616
        %2650 = vst.msk [vmem:[%s163 + $0xf8] sm:$0xff] %vm2618, %v2617
        %s2651 = sand.u32 %s93, 1
        %s2652 = scalar_lea.sflag [#allocation3], %s2651
        %s2653 = sand.u32 %s93, 1
        %s2654 = smul.addr %s2653, 256
        %s2655 = scalar_lea.vmem [#allocation2], %s2654
        // Predicated region
        $region33: #{tpu_custom_call.1} parent=31 // pred_check
          %p2656 = pneg %p103
        $region34: #{tpu_custom_call.1} parent=31 // pred_check_branch
          %2658 = sbr.rel (%p2656) target = $region36
        $region35: #{tpu_custom_call.1} parent=31 // pred_region
          %2660 = vsyncadd %s2652, 0
          %s2661 = smul.addr %s17, 32
          %s2662 = smul.addr %s2661, 8
          %s2663 = scalar_lea.hbm %s3, %s2662
          %s2664 = sshll.u32 %s2655, 4
          %s2665 = int_to_ptr.vmem [resolvable:$true] %s2664
          %s2666 = sshll.u32 %s2663, 4
          %s2667 = int_to_ptr.hbm [resolvable:$true] %s2666
          %2672 = dma.vmem_to_hbm [thread:$0]  %s2665, 4096, %s2667, %s2652, 128, 128, 8
        $region36: #{tpu_custom_call.1} parent=31 // pred_fallthru
          _
      $region32: #{tpu_custom_call.1} parent=5 // pred_fallthru
        _
      %p2673 = scmp.le.s32.totalorder 2, %s12
      // Predicated region
      $region37: #{tpu_custom_call.1} parent=5 // pred_check
        %p2674 = pneg %p2673
      $region38: #{tpu_custom_call.1} parent=5 // pred_check_branch
        %2676 = sbr.rel (%p2674) target = $region40
      $region39: #{tpu_custom_call.1} parent=5 // pred_region
        %s2677 = ssub.s32 %s12, 2
        // Predicated region
        $region41: #{tpu_custom_call.1} parent=39 // pred_check
          %p2678 = pneg %p109
        $region42: #{tpu_custom_call.1} parent=39 // pred_check_branch
          %2680 = sbr.rel (%p2678) target = $region44
        $region43: #{tpu_custom_call.1} parent=39 // pred_region
          %s2681 = sand.u32 %s94, 1
          %s2682 = scalar_lea.sflag [#allocation3], %s2681
          %s2683 = sand.u32 %s94, 1
          %s2684 = smul.addr %s2683, 256
          %s2685 = scalar_lea.vmem [#allocation2], %s2684
          %2687 = dma.done %s2682, 4096
        $region44: #{tpu_custom_call.1} parent=39 // pred_fallthru
          _
      $region40: #{tpu_custom_call.1} parent=5 // pred_fallthru
        _
    $region6: #{tpu_custom_call.1} parent=1 // loop_footer
      %s16 = sadd.s32 1, %s12
    $region7: #{tpu_custom_call.1} parent=1 // loop_footer_branch
      %11 = sbr.rel target = $region3
    $region8: #{tpu_custom_call.1} parent=1 // loop_exit
      _
    %2688 = vsyncpa [#allocation3], 1
    %s2689 = scalar_lea.sflag [#allocation3], 1
    %2690 = vsyncpa %s2689, 1

</llo_original>
